<compile_context>
chip_gen: v7x
topology: tpu7x:2x2x1
jax: 0.10.0
libtpu: 0.0.40
codegen_flags: <defaults>
</compile_context>

<pallas_src>
import functools

import numpy as np
import jax
import jax.numpy as jnp
from jax.experimental import pallas as pl
from jax.experimental.pallas import tpu as pltpu


# ----------------------------------------------------------------------------
# Winograd transform matrices (same values as the PyTorch helper).
# Returned as numpy: they are baked into the kernel as compile-time constants.
# ----------------------------------------------------------------------------
def get_transform_matrices(m=2):
    if m == 2:
        B = np.array(
            [[1.0, 0.0, 0.0, 0.0],
             [0.0, 1.0, -1.0, 1.0],
             [-1.0, 1.0, 1.0, 0.0],
             [0.0, 0.0, 0.0, -1.0]], dtype=np.float32)
        B_T = B.T
        G = np.array(
            [[1.0, 0.0, 0.0],
             [0.5, 0.5, 0.5],
             [0.5, -0.5, 0.5],
             [0.0, 0.0, 1.0]], dtype=np.float32)
        G_T = G.T
        A = np.array(
            [[1.0, 0.0],
             [1.0, 1.0],
             [1.0, -1.0],
             [0.0, -1.0]], dtype=np.float32)
        A_T = A.T
    elif m == 4:
        B_T = np.array(
            [[4.0, 0.0, -5.0, 0.0, 1.0, 0.0],
             [0.0, -4.0, -4.0, 1.0, 1.0, 0.0],
             [0.0, 4.0, -4.0, -1.0, 1.0, 0.0],
             [0.0, -2.0, -1.0, 2.0, 1.0, 0.0],
             [0.0, 2.0, -1.0, -2.0, 1.0, 0.0],
             [0.0, 4.0, 0.0, -5.0, 0.0, 1.0]], dtype=np.float32)
        B = B_T.T
        G = np.array(
            [[1 / 4, 0.0, 0.0],
             [-1 / 6, -1 / 6, -1 / 6],
             [-1 / 6, 1 / 6, -1 / 6],
             [1 / 24, 1 / 12, 1 / 6],
             [1 / 24, -1 / 12, 1 / 6],
             [0.0, 0.0, 1.0]], dtype=np.float32)
        G_T = G.T
        A_T = np.array(
            [[1.0, 1.0, 1.0, 1.0, 1.0, 0.0],
             [0.0, 1.0, -1.0, 2.0, -2.0, 0.0],
             [0.0, 1.0, 1.0, 4.0, 4.0, 0.0],
             [0.0, 1.0, -1.0, 8.0, -8.0, 1.0]], dtype=np.float32)
        A = A_T.T
    else:
        raise ValueError("only m in {2, 4} supported")
    return A, A_T, B, B_T, G, G_T


# ----------------------------------------------------------------------------
# Helpers for unrolled constant-coefficient linear combinations (VPU work).
# ----------------------------------------------------------------------------
def _lincomb(coeffs, slabs):
    """sum_i coeffs[i] * slabs[i], skipping zeros/None; coeffs are Python floats."""
    acc = None
    for c, s in zip(coeffs, slabs):
        if s is None:
            continue
        c = float(c)
        if c == 0.0:
            continue
        term = s if c == 1.0 else (-s if c == -1.0 else c * s)
        acc = term if acc is None else acc + term
    if acc is None:
        acc = jnp.zeros_like(next(s for s in slabs if s is not None))
    return acc


def _axpy(acc, coeff, val):
    """acc + coeff*val with zero/unit-coefficient folding; acc may be None."""
    coeff = float(coeff)
    if coeff == 0.0:
        return acc
    term = val if coeff == 1.0 else (-val if coeff == -1.0 else coeff * val)
    return term if acc is None else acc + term


def _round_up(n, k):
    return ((n + k - 1) // k) * k


# ----------------------------------------------------------------------------
# Fused Pallas kernel: per (P tile, K tile):
#     V = B^T d B  ->  M = U V  ->  (fused) Z += A_T M  ->  O = Z A
# ----------------------------------------------------------------------------
def _winograd_fused_kernel(d_ref, u_ref, o_ref, *, B_T, B, A_T, A, a, m, C,
                           mxu_dtype):
    # d_ref: (a*a*C, tp)  flattened input tiles; slab s -> rows [s*C, s*C+C)
    # u_ref: (a*a, tk, C) transformed filters (resident; stored in mxu_dtype)
    # o_ref: (m*m, tk, tp) output-tile elements, f32
    Z = [[None] * a for _ in range(m)]   # fused A^T accumulators: m*a live slabs

    for x in range(a):
        # Input transform, stage 1 (row x): W_x[l] = sum_j B_T[x, j] * d[j, l].
        # d slabs are re-read from the VMEM block per x instead of being kept
        # live across the whole kernel (keeps the live set at ~a + m*a slabs).
        W_x = [
            _lincomb([B_T[x, j] for j in range(a)],
                     [d_ref[pl.ds((j * a + l) * C, C), :] for j in range(a)])
            for l in range(a)
        ]
        for y in range(a):
            # stage 2 (f32, VPU): V[x, y] = sum_l W_x[l] * B[l, y]
            v_xy = _lincomb([B[l, y] for l in range(a)], W_x)          # (C, tp)
            # spectral matmul (MXU): bf16/f32 operands, f32 accumulation
            m_xy = jnp.dot(u_ref[x * a + y],
                           v_xy.astype(mxu_dtype),
                           preferred_element_type=jnp.float32)          # (tk, tp)
            # fused output transform, stage 1: Z[i, y] += A_T[i, x] * M[x, y]
            for i in range(m):
                Z[i][y] = _axpy(Z[i][y], A_T[i, x], m_xy)

    # Output transform, stage 2: O[i, j] = sum_y Z[i, y] * A[y, j]
    for i in range(m):
        for j in range(m):
            o_ref[i * m + j] = _lincomb([A[y, j] for y in range(a)],
                                        Z[i]).astype(o_ref.dtype)


# ----------------------------------------------------------------------------
# VMEM- / generation-aware tile selection.
# ----------------------------------------------------------------------------
def _vmem_capacity_bytes():
    try:
        info = pltpu.get_tpu_info()
        for name in ("vmem_capacity_bytes", "vmem_bytes", "vmem_size_bytes"):
            v = getattr(info, name, None)
            if v:
                return int(v)
    except Exception:
        pass
    return 64 * 1024 * 1024   # conservative fallback: v7x per-TensorCore VMEM


def _choose_k_tile(K):
    if K <= 256:
        return K
    for tk in (256, 128):
        if K % tk == 0:
            return tk
    # TODO(synk): large ragged K falls back to a full-extent block.
    return K


def _choose_tiles(P, C, K, a, m, mxu_bytes):
    """Return (tk, tp, P_padded, vmem_limit_bytes), VMEM-budget aware."""
    cap = _vmem_capacity_bytes()
    budget = int(0.70 * cap)

    tk = _choose_k_tile(K)
    c8 = _round_up(C, 8)
    k8 = _round_up(tk, 8)
    d_rows = _round_up(a * a * C, 8)

    # Bytes per lane-column of tp (with 8-sublane padding baked in):
    per_tp = 4 * (2 * d_rows            # double-buffered D block (f32)
                  + 2 * m * m * k8      # double-buffered O block (f32)
                  + a * c8              # live W_x slabs (f32)
                  + m * a * k8          # live Z accumulators (f32)
                  + 2 * max(c8, k8))    # transient v / M slabs
    u_bytes = a * a * k8 * _round_up(C, 128) * mxu_bytes
    fixed = 2 * u_bytes + (2 << 20)     # U (conservatively x2) + slack

    tp = (budget - fixed) // per_tp
    tp = max(128, (tp // 128) * 128)
    tp = min(tp, 2048)                            # >~512 lanes: flat returns
    tp = min(tp, _round_up(P, 128))
    if P >= 256:                                  # >=2 grid steps -> both v7x TCs busy
        tp = min(tp, max(128, _round_up((P + 1) // 2, 128)))
    # TODO(synk): if even tp=128 overflows the budget (very large C), add a
    # C-reduction grid axis ('arbitrary', f32 accumulator scratch) instead.

    P_pad = _round_up(P, tp)
    est = fixed + per_tp * tp
    vmem_limit = min(int(0.85 * cap), max(32 * 1024 * 1024, est + (8 << 20)))
    return tk, tp, P_pad, vmem_limit


# ----------------------------------------------------------------------------
# Full forward pass, reproducing Winograd_Parall.forward semantics.
# ----------------------------------------------------------------------------
def winograd_parall_forward(x, weight, m, use_bf16_matmul=None):
    N, C, H, W = x.shape
    K, _, r, _ = weight.shape
    assert H == W
    a = m + r - 1
    if not (H >= 4 and H % 2 == 0):
        raise Exception('Only input for perfect tiling is supported.')
    out_size = H - r + 1
    if out_size % m != 0:
        raise Exception('Only input for perfect tiling is supported.')
    T = out_size // m
    P = N * T * T

    if use_bf16_matmul is None:
        # bf16 operands are fine for F(2,3); the m=4 transform coefficients
        # (4/5/8) amplify rounding, so default to f32 there.
        use_bf16_matmul = (m == 2)
    mxu_dtype = jnp.bfloat16 if use_bf16_matmul else jnp.float32
    mxu_bytes = 2 if use_bf16_matmul else 4

    A, A_T, B, B_T, G, G_T = get_transform_matrices(m)   # numpy constants

    # Filter transform (tiny): U[x*a+y, k, c] = (G w[k,c] G^T)[x, y], stored
    # directly in the MXU operand dtype (no per-step cast, half the VMEM).
    U_s = jnp.einsum('ij,kcjl,lm->imkc', jnp.asarray(G),
                     weight.astype(jnp.float32),
                     jnp.asarray(G_T)).reshape(a * a, K, C).astype(mxu_dtype)

    # Tile gather (flattened):
    #   D[(j*a+l)*C + c, n*T*T + t1*T + t2] = x[n, c, t1*m + j, t2*m + l]
    # Same ordering as F.unfold(kernel=(a,a), stride=m) + the reference
    # reshape/permute; one fused gather/transpose pass in XLA.
    # TODO(synk): for HBM-bound shallow-C layers on v5e the (a/m)^2 data
    # amplification of this unfold matters; moving the gather into the kernel
    # (x via memory_space=pl.ANY + manual row-strip DMA) would remove it.
    idx = (jnp.arange(T) * m)[:, None] + jnp.arange(a)[None, :]       # (T, a)
    patches = x[:, :, idx[:, None, :, None], idx[None, :, None, :]]   # (N,C,T,T,a,a)
    D = jnp.transpose(patches, (4, 5, 1, 0, 2, 3)).reshape(a * a * C, P)
    D = D.astype(jnp.float32)

    tk, tp, P_pad, vmem_limit = _choose_tiles(P, C, K, a, m, mxu_bytes)
    if P_pad > P:
        D = jnp.pad(D, ((0, 0), (0, P_pad - P)))    # lane-dense padded P
    grid_p = P_pad // tp
    grid_k = K // tk

    kernel = functools.partial(_winograd_fused_kernel, B_T=B_T, B=B, A_T=A_T,
                               A=A, a=a, m=m, C=C, mxu_dtype=mxu_dtype)

    # Advisory cost estimate (MXU matmuls dominate; transforms are VPU filler).
    # TODO(synk): shallow-C layers leave the 128/256-deep MXU contraction mostly
    # idle; a block-diagonal (a*a*K, a*a*C) spectral batching would deepen it.
    cost = pl.CostEstimate(
        flops=2 * (a * a) * K * C * P_pad,
        transcendentals=0,
        bytes_accessed=int(D.size * 4 + U_s.size * mxu_bytes
                           + (m * m) * K * P_pad * 4))

    # U stays VMEM-resident (block index independent of the P axis).  Single-
    # buffer it when the second copy is big enough to matter for tp headroom.
    u_block_bytes = a * a * _round_up(tk, 8) * _round_up(C, 128) * mxu_bytes
    u_spec_kwargs = {}
    if u_block_bytes > (2 << 20):
        u_spec_kwargs["pipeline_mode"] = pl.Buffered(1)

    O_flat = pl.pallas_call(
        kernel,
        out_shape=jax.ShapeDtypeStruct((m * m, K, P_pad), jnp.float32),
        grid_spec=pltpu.PrefetchScalarGridSpec(
            num_scalar_prefetch=0,
            grid=(grid_p, grid_k),                 # k innermost: D block stays put
            in_specs=[
                pl.BlockSpec((a * a * C, tp), lambda p, k: (0, p)),    # input tiles
                pl.BlockSpec((a * a, tk, C), lambda p, k: (0, k, 0),   # U (resident)
                             **u_spec_kwargs),
            ],
            out_specs=pl.BlockSpec((m * m, tk, tp), lambda p, k: (0, k, p)),
        ),
        compiler_params=pltpu.CompilerParams(
            dimension_semantics=("parallel", "parallel"),
            vmem_limit_bytes=vmem_limit),
        cost_estimate=cost,
    )(D, U_s)

    # O_flat[i*m + j, k, n*T*T + t1*T + t2] -> Y[n, k, t1*m + i, t2*m + j]
    Y = O_flat[:, :, :P].reshape(m, m, K, N, T, T)
    Y = jnp.transpose(Y, (3, 2, 4, 0, 5, 1)).reshape(N, K, out_size, out_size)
    return Y


# ----------------------------------------------------------------------------
if __name__ == "__main__":
    m = 2                       # output tile size (Winograd_Parall(m=2))
    N, C, K, H, r = 2, 4, 8, 16, 3

    key = jax.random.PRNGKey(0)
    kx, kw = jax.random.split(key)
    x = jax.random.normal(kx, (N, C, H, H), dtype=jnp.float32)
    weight = 0.1 * jax.random.normal(kw, (K, C, r, r), dtype=jnp.float32)

    # Reference: direct valid convolution (cross-correlation, like nn.Conv2d).
    y_ref = jax.lax.conv_general_dilated(
        x, weight, window_strides=(1, 1), padding='VALID',
        dimension_numbers=('NCHW', 'OIHW', 'NCHW'))
    y_ref = jax.block_until_ready(y_ref)
    out_shape = (N, K, H - r + 1, H - r + 1)

    # Exact path (f32 MXU operands) — tight check.
    fwd_f32 = jax.jit(functools.partial(winograd_parall_forward, m=m,
                                        use_bf16_matmul=False))
    y32 = jax.block_until_ready(fwd_f32(x, weight))
    assert y32.shape == out_shape, y32.shape
    assert jnp.allclose(y32, y_ref, atol=1e-3, rtol=1e-3), \
        float(jnp.max(jnp.abs(y32 - y_ref)))

    # Fast path (bf16 MXU operands, f32 accumulation) — looser check, since
    # Winograd intermediates amplify bf16 rounding relative to the output.
    fwd_bf16 = jax.jit(functools.partial(winograd_parall_forward, m=m,
                                         use_bf16_matmul=True))
    y16 = jax.block_until_ready(fwd_bf16(x, weight))
    assert y16.shape == out_shape, y16.shape
    assert float(jnp.max(jnp.abs(y16 - y_ref))) < 0.25, \
        float(jnp.max(jnp.abs(y16 - y_ref)))

    print("KERNEL_OK")
</pallas_src>

<mosaic_0001>
module attributes {stable_mosaic.version = 11 : i64} {
  func.func @_winograd_fused_kernel(%arg0: i32, %arg1: i32, %arg2: memref<64x128xf32, #tpu.memory_space<vmem>>, %arg3: memref<16x8x4xf32, #tpu.memory_space<vmem>>, %arg4: memref<4x8x128xf32, #tpu.memory_space<vmem>>) attributes {dimension_semantics = [#tpu.dimension_semantics<parallel>, #tpu.dimension_semantics<parallel>], iteration_bounds = array<i64: 1, 1>, scalar_prefetch = 0 : i64, scratch_operands = 0 : i64, tpu.core_type = #tpu.core_type<tc>, window_params = [{transform_indices = @transform_0, window_bounds = array<i64: 64, 128>}, {transform_indices = @transform_1, window_bounds = array<i64: 16, 8, 4>}, {transform_indices = @transform_2, window_bounds = array<i64: 4, 8, 128>}]} {
    %c0 = arith.constant 0 : index
    %c0_0 = arith.constant 0 : index
    %0 = vector.load %arg2[%c0, %c0_0] : memref<64x128xf32, #tpu.memory_space<vmem>>, vector<4x128xf32>
    %c32 = arith.constant 32 : index
    %c0_1 = arith.constant 0 : index
    %1 = vector.load %arg2[%c32, %c0_1] : memref<64x128xf32, #tpu.memory_space<vmem>>, vector<4x128xf32>
    %cst = arith.constant 0.000000e+00 : f32
    %2 = vector.broadcast %cst : f32 to vector<4x128xf32>
    %3 = arith.subf %2, %1 : vector<4x128xf32>
    %4 = arith.addf %0, %3 : vector<4x128xf32>
    %c4 = arith.constant 4 : index
    %c0_2 = arith.constant 0 : index
    %5 = vector.load %arg2[%c4, %c0_2] : memref<64x128xf32, #tpu.memory_space<vmem>>, vector<4x128xf32>
    %c36 = arith.constant 36 : index
    %c0_3 = arith.constant 0 : index
    %6 = vector.load %arg2[%c36, %c0_3] : memref<64x128xf32, #tpu.memory_space<vmem>>, vector<4x128xf32>
    %cst_4 = arith.constant 0.000000e+00 : f32
    %7 = vector.broadcast %cst_4 : f32 to vector<4x128xf32>
    %8 = arith.subf %7, %6 : vector<4x128xf32>
    %9 = arith.addf %5, %8 : vector<4x128xf32>
    %c8 = arith.constant 8 : index
    %c0_5 = arith.constant 0 : index
    %10 = vector.load %arg2[%c8, %c0_5] : memref<64x128xf32, #tpu.memory_space<vmem>>, vector<4x128xf32>
    %c40 = arith.constant 40 : index
    %c0_6 = arith.constant 0 : index
    %11 = vector.load %arg2[%c40, %c0_6] : memref<64x128xf32, #tpu.memory_space<vmem>>, vector<4x128xf32>
    %cst_7 = arith.constant 0.000000e+00 : f32
    %12 = vector.broadcast %cst_7 : f32 to vector<4x128xf32>
    %13 = arith.subf %12, %11 : vector<4x128xf32>
    %14 = arith.addf %10, %13 : vector<4x128xf32>
    %c12 = arith.constant 12 : index
    %c0_8 = arith.constant 0 : index
    %15 = vector.load %arg2[%c12, %c0_8] : memref<64x128xf32, #tpu.memory_space<vmem>>, vector<4x128xf32>
    %c44 = arith.constant 44 : index
    %c0_9 = arith.constant 0 : index
    %16 = vector.load %arg2[%c44, %c0_9] : memref<64x128xf32, #tpu.memory_space<vmem>>, vector<4x128xf32>
    %cst_10 = arith.constant 0.000000e+00 : f32
    %17 = vector.broadcast %cst_10 : f32 to vector<4x128xf32>
    %18 = arith.subf %17, %16 : vector<4x128xf32>
    %19 = arith.addf %15, %18 : vector<4x128xf32>
    %cst_11 = arith.constant 0.000000e+00 : f32
    %20 = vector.broadcast %cst_11 : f32 to vector<4x128xf32>
    %21 = arith.subf %20, %14 : vector<4x128xf32>
    %22 = arith.addf %4, %21 : vector<4x128xf32>
    %c0_12 = arith.constant 0 : index
    %c0_13 = arith.constant 0 : index
    %c0_14 = arith.constant 0 : index
    %23 = vector.load %arg3[%c0_12, %c0_13, %c0_14] : memref<16x8x4xf32, #tpu.memory_space<vmem>>, vector<1x8x4xf32>
    %24 = vector.shape_cast %23 : vector<1x8x4xf32> to vector<8x4xf32>
    %cst_15 = arith.constant dense<0.000000e+00> : vector<8x128xf32>
    %25 = tpu.matmul %24, %22, %cst_15 {dimension_numbers = #tpu.dot_dimension_numbers<[1], [0], [0], [1], [0, 0, 1, 1], [], []>} : vector<8x4xf32>, vector<4x128xf32>, vector<8x128xf32> -> vector<8x128xf32>
    %26 = arith.addf %9, %14 : vector<4x128xf32>
    %c1 = arith.constant 1 : index
    %c0_16 = arith.constant 0 : index
    %c0_17 = arith.constant 0 : index
    %27 = vector.load %arg3[%c1, %c0_16, %c0_17] : memref<16x8x4xf32, #tpu.memory_space<vmem>>, vector<1x8x4xf32>
    %28 = vector.shape_cast %27 : vector<1x8x4xf32> to vector<8x4xf32>
    %cst_18 = arith.constant dense<0.000000e+00> : vector<8x128xf32>
    %29 = tpu.matmul %28, %26, %cst_18 {dimension_numbers = #tpu.dot_dimension_numbers<[1], [0], [0], [1], [0, 0, 1, 1], [], []>} : vector<8x4xf32>, vector<4x128xf32>, vector<8x128xf32> -> vector<8x128xf32>
    %cst_19 = arith.constant 0.000000e+00 : f32
    %30 = vector.broadcast %cst_19 : f32 to vector<4x128xf32>
    %31 = arith.subf %30, %9 : vector<4x128xf32>
    %32 = arith.addf %31, %14 : vector<4x128xf32>
    %c2 = arith.constant 2 : index
    %c0_20 = arith.constant 0 : index
    %c0_21 = arith.constant 0 : index
    %33 = vector.load %arg3[%c2, %c0_20, %c0_21] : memref<16x8x4xf32, #tpu.memory_space<vmem>>, vector<1x8x4xf32>
    %34 = vector.shape_cast %33 : vector<1x8x4xf32> to vector<8x4xf32>
    %cst_22 = arith.constant dense<0.000000e+00> : vector<8x128xf32>
    %35 = tpu.matmul %34, %32, %cst_22 {dimension_numbers = #tpu.dot_dimension_numbers<[1], [0], [0], [1], [0, 0, 1, 1], [], []>} : vector<8x4xf32>, vector<4x128xf32>, vector<8x128xf32> -> vector<8x128xf32>
    %cst_23 = arith.constant 0.000000e+00 : f32
    %36 = vector.broadcast %cst_23 : f32 to vector<4x128xf32>
    %37 = arith.subf %36, %19 : vector<4x128xf32>
    %38 = arith.addf %9, %37 : vector<4x128xf32>
    %c3 = arith.constant 3 : index
    %c0_24 = arith.constant 0 : index
    %c0_25 = arith.constant 0 : index
    %39 = vector.load %arg3[%c3, %c0_24, %c0_25] : memref<16x8x4xf32, #tpu.memory_space<vmem>>, vector<1x8x4xf32>
    %40 = vector.shape_cast %39 : vector<1x8x4xf32> to vector<8x4xf32>
    %cst_26 = arith.constant dense<0.000000e+00> : vector<8x128xf32>
    %41 = tpu.matmul %40, %38, %cst_26 {dimension_numbers = #tpu.dot_dimension_numbers<[1], [0], [0], [1], [0, 0, 1, 1], [], []>} : vector<8x4xf32>, vector<4x128xf32>, vector<8x128xf32> -> vector<8x128xf32>
    %c16 = arith.constant 16 : index
    %c0_27 = arith.constant 0 : index
    %42 = vector.load %arg2[%c16, %c0_27] : memref<64x128xf32, #tpu.memory_space<vmem>>, vector<4x128xf32>
    %c32_28 = arith.constant 32 : index
    %c0_29 = arith.constant 0 : index
    %43 = vector.load %arg2[%c32_28, %c0_29] : memref<64x128xf32, #tpu.memory_space<vmem>>, vector<4x128xf32>
    %44 = arith.addf %42, %43 : vector<4x128xf32>
    %c20 = arith.constant 20 : index
    %c0_30 = arith.constant 0 : index
    %45 = vector.load %arg2[%c20, %c0_30] : memref<64x128xf32, #tpu.memory_space<vmem>>, vector<4x128xf32>
    %c36_31 = arith.constant 36 : index
    %c0_32 = arith.constant 0 : index
    %46 = vector.load %arg2[%c36_31, %c0_32] : memref<64x128xf32, #tpu.memory_space<vmem>>, vector<4x128xf32>
    %47 = arith.addf %45, %46 : vector<4x128xf32>
    %c24 = arith.constant 24 : index
    %c0_33 = arith.constant 0 : index
    %48 = vector.load %arg2[%c24, %c0_33] : memref<64x128xf32, #tpu.memory_space<vmem>>, vector<4x128xf32>
    %c40_34 = arith.constant 40 : index
    %c0_35 = arith.constant 0 : index
    %49 = vector.load %arg2[%c40_34, %c0_35] : memref<64x128xf32, #tpu.memory_space<vmem>>, vector<4x128xf32>
    %50 = arith.addf %48, %49 : vector<4x128xf32>
    %c28 = arith.constant 28 : index
    %c0_36 = arith.constant 0 : index
    %51 = vector.load %arg2[%c28, %c0_36] : memref<64x128xf32, #tpu.memory_space<vmem>>, vector<4x128xf32>
    %c44_37 = arith.constant 44 : index
    %c0_38 = arith.constant 0 : index
    %52 = vector.load %arg2[%c44_37, %c0_38] : memref<64x128xf32, #tpu.memory_space<vmem>>, vector<4x128xf32>
    %53 = arith.addf %51, %52 : vector<4x128xf32>
    %cst_39 = arith.constant 0.000000e+00 : f32
    %54 = vector.broadcast %cst_39 : f32 to vector<4x128xf32>
    %55 = arith.subf %54, %50 : vector<4x128xf32>
    %56 = arith.addf %44, %55 : vector<4x128xf32>
    %c4_40 = arith.constant 4 : index
    %c0_41 = arith.constant 0 : index
    %c0_42 = arith.constant 0 : index
    %57 = vector.load %arg3[%c4_40, %c0_41, %c0_42] : memref<16x8x4xf32, #tpu.memory_space<vmem>>, vector<1x8x4xf32>
    %58 = vector.shape_cast %57 : vector<1x8x4xf32> to vector<8x4xf32>
    %cst_43 = arith.constant dense<0.000000e+00> : vector<8x128xf32>
    %59 = tpu.matmul %58, %56, %cst_43 {dimension_numbers = #tpu.dot_dimension_numbers<[1], [0], [0], [1], [0, 0, 1, 1], [], []>} : vector<8x4xf32>, vector<4x128xf32>, vector<8x128xf32> -> vector<8x128xf32>
    %60 = arith.addf %25, %59 : vector<8x128xf32>
    %61 = arith.addf %47, %50 : vector<4x128xf32>
    %c5 = arith.constant 5 : index
    %c0_44 = arith.constant 0 : index
    %c0_45 = arith.constant 0 : index
    %62 = vector.load %arg3[%c5, %c0_44, %c0_45] : memref<16x8x4xf32, #tpu.memory_space<vmem>>, vector<1x8x4xf32>
    %63 = vector.shape_cast %62 : vector<1x8x4xf32> to vector<8x4xf32>
    %cst_46 = arith.constant dense<0.000000e+00> : vector<8x128xf32>
    %64 = tpu.matmul %63, %61, %cst_46 {dimension_numbers = #tpu.dot_dimension_numbers<[1], [0], [0], [1], [0, 0, 1, 1], [], []>} : vector<8x4xf32>, vector<4x128xf32>, vector<8x128xf32> -> vector<8x128xf32>
    %65 = arith.addf %29, %64 : vector<8x128xf32>
    %cst_47 = arith.constant 0.000000e+00 : f32
    %66 = vector.broadcast %cst_47 : f32 to vector<4x128xf32>
    %67 = arith.subf %66, %47 : vector<4x128xf32>
    %68 = arith.addf %67, %50 : vector<4x128xf32>
    %c6 = arith.constant 6 : index
    %c0_48 = arith.constant 0 : index
    %c0_49 = arith.constant 0 : index
    %69 = vector.load %arg3[%c6, %c0_48, %c0_49] : memref<16x8x4xf32, #tpu.memory_space<vmem>>, vector<1x8x4xf32>
    %70 = vector.shape_cast %69 : vector<1x8x4xf32> to vector<8x4xf32>
    %cst_50 = arith.constant dense<0.000000e+00> : vector<8x128xf32>
    %71 = tpu.matmul %70, %68, %cst_50 {dimension_numbers = #tpu.dot_dimension_numbers<[1], [0], [0], [1], [0, 0, 1, 1], [], []>} : vector<8x4xf32>, vector<4x128xf32>, vector<8x128xf32> -> vector<8x128xf32>
    %72 = arith.addf %35, %71 : vector<8x128xf32>
    %cst_51 = arith.constant 0.000000e+00 : f32
    %73 = vector.broadcast %cst_51 : f32 to vector<4x128xf32>
    %74 = arith.subf %73, %53 : vector<4x128xf32>
    %75 = arith.addf %47, %74 : vector<4x128xf32>
    %c7 = arith.constant 7 : index
    %c0_52 = arith.constant 0 : index
    %c0_53 = arith.constant 0 : index
    %76 = vector.load %arg3[%c7, %c0_52, %c0_53] : memref<16x8x4xf32, #tpu.memory_space<vmem>>, vector<1x8x4xf32>
    %77 = vector.shape_cast %76 : vector<1x8x4xf32> to vector<8x4xf32>
    %cst_54 = arith.constant dense<0.000000e+00> : vector<8x128xf32>
    %78 = tpu.matmul %77, %75, %cst_54 {dimension_numbers = #tpu.dot_dimension_numbers<[1], [0], [0], [1], [0, 0, 1, 1], [], []>} : vector<8x4xf32>, vector<4x128xf32>, vector<8x128xf32> -> vector<8x128xf32>
    %79 = arith.addf %41, %78 : vector<8x128xf32>
    %c16_55 = arith.constant 16 : index
    %c0_56 = arith.constant 0 : index
    %80 = vector.load %arg2[%c16_55, %c0_56] : memref<64x128xf32, #tpu.memory_space<vmem>>, vector<4x128xf32>
    %c32_57 = arith.constant 32 : index
    %c0_58 = arith.constant 0 : index
    %81 = vector.load %arg2[%c32_57, %c0_58] : memref<64x128xf32, #tpu.memory_space<vmem>>, vector<4x128xf32>
    %cst_59 = arith.constant 0.000000e+00 : f32
    %82 = vector.broadcast %cst_59 : f32 to vector<4x128xf32>
    %83 = arith.subf %82, %80 : vector<4x128xf32>
    %84 = arith.addf %83, %81 : vector<4x128xf32>
    %c20_60 = arith.constant 20 : index
    %c0_61 = arith.constant 0 : index
    %85 = vector.load %arg2[%c20_60, %c0_61] : memref<64x128xf32, #tpu.memory_space<vmem>>, vector<4x128xf32>
    %c36_62 = arith.constant 36 : index
    %c0_63 = arith.constant 0 : index
    %86 = vector.load %arg2[%c36_62, %c0_63] : memref<64x128xf32, #tpu.memory_space<vmem>>, vector<4x128xf32>
    %cst_64 = arith.constant 0.000000e+00 : f32
    %87 = vector.broadcast %cst_64 : f32 to vector<4x128xf32>
    %88 = arith.subf %87, %85 : vector<4x128xf32>
    %89 = arith.addf %88, %86 : vector<4x128xf32>
    %c24_65 = arith.constant 24 : index
    %c0_66 = arith.constant 0 : index
    %90 = vector.load %arg2[%c24_65, %c0_66] : memref<64x128xf32, #tpu.memory_space<vmem>>, vector<4x128xf32>
    %c40_67 = arith.constant 40 : index
    %c0_68 = arith.constant 0 : index
    %91 = vector.load %arg2[%c40_67, %c0_68] : memref<64x128xf32, #tpu.memory_space<vmem>>, vector<4x128xf32>
    %cst_69 = arith.constant 0.000000e+00 : f32
    %92 = vector.broadcast %cst_69 : f32 to vector<4x128xf32>
    %93 = arith.subf %92, %90 : vector<4x128xf32>
    %94 = arith.addf %93, %91 : vector<4x128xf32>
    %c28_70 = arith.constant 28 : index
    %c0_71 = arith.constant 0 : index
    %95 = vector.load %arg2[%c28_70, %c0_71] : memref<64x128xf32, #tpu.memory_space<vmem>>, vector<4x128xf32>
    %c44_72 = arith.constant 44 : index
    %c0_73 = arith.constant 0 : index
    %96 = vector.load %arg2[%c44_72, %c0_73] : memref<64x128xf32, #tpu.memory_space<vmem>>, vector<4x128xf32>
    %cst_74 = arith.constant 0.000000e+00 : f32
    %97 = vector.broadcast %cst_74 : f32 to vector<4x128xf32>
    %98 = arith.subf %97, %95 : vector<4x128xf32>
    %99 = arith.addf %98, %96 : vector<4x128xf32>
    %cst_75 = arith.constant 0.000000e+00 : f32
    %100 = vector.broadcast %cst_75 : f32 to vector<4x128xf32>
    %101 = arith.subf %100, %94 : vector<4x128xf32>
    %102 = arith.addf %84, %101 : vector<4x128xf32>
    %c8_76 = arith.constant 8 : index
    %c0_77 = arith.constant 0 : index
    %c0_78 = arith.constant 0 : index
    %103 = vector.load %arg3[%c8_76, %c0_77, %c0_78] : memref<16x8x4xf32, #tpu.memory_space<vmem>>, vector<1x8x4xf32>
    %104 = vector.shape_cast %103 : vector<1x8x4xf32> to vector<8x4xf32>
    %cst_79 = arith.constant dense<0.000000e+00> : vector<8x128xf32>
    %105 = tpu.matmul %104, %102, %cst_79 {dimension_numbers = #tpu.dot_dimension_numbers<[1], [0], [0], [1], [0, 0, 1, 1], [], []>} : vector<8x4xf32>, vector<4x128xf32>, vector<8x128xf32> -> vector<8x128xf32>
    %106 = arith.addf %60, %105 : vector<8x128xf32>
    %cst_80 = arith.constant 0.000000e+00 : f32
    %107 = vector.broadcast %cst_80 : f32 to vector<8x128xf32>
    %108 = arith.subf %107, %105 : vector<8x128xf32>
    %109 = arith.addf %59, %108 : vector<8x128xf32>
    %110 = arith.addf %89, %94 : vector<4x128xf32>
    %c9 = arith.constant 9 : index
    %c0_81 = arith.constant 0 : index
    %c0_82 = arith.constant 0 : index
    %111 = vector.load %arg3[%c9, %c0_81, %c0_82] : memref<16x8x4xf32, #tpu.memory_space<vmem>>, vector<1x8x4xf32>
    %112 = vector.shape_cast %111 : vector<1x8x4xf32> to vector<8x4xf32>
    %cst_83 = arith.constant dense<0.000000e+00> : vector<8x128xf32>
    %113 = tpu.matmul %112, %110, %cst_83 {dimension_numbers = #tpu.dot_dimension_numbers<[1], [0], [0], [1], [0, 0, 1, 1], [], []>} : vector<8x4xf32>, vector<4x128xf32>, vector<8x128xf32> -> vector<8x128xf32>
    %114 = arith.addf %65, %113 : vector<8x128xf32>
    %cst_84 = arith.constant 0.000000e+00 : f32
    %115 = vector.broadcast %cst_84 : f32 to vector<8x128xf32>
    %116 = arith.subf %115, %113 : vector<8x128xf32>
    %117 = arith.addf %64, %116 : vector<8x128xf32>
    %cst_85 = arith.constant 0.000000e+00 : f32
    %118 = vector.broadcast %cst_85 : f32 to vector<4x128xf32>
    %119 = arith.subf %118, %89 : vector<4x128xf32>
    %120 = arith.addf %119, %94 : vector<4x128xf32>
    %c10 = arith.constant 10 : index
    %c0_86 = arith.constant 0 : index
    %c0_87 = arith.constant 0 : index
    %121 = vector.load %arg3[%c10, %c0_86, %c0_87] : memref<16x8x4xf32, #tpu.memory_space<vmem>>, vector<1x8x4xf32>
    %122 = vector.shape_cast %121 : vector<1x8x4xf32> to vector<8x4xf32>
    %cst_88 = arith.constant dense<0.000000e+00> : vector<8x128xf32>
    %123 = tpu.matmul %122, %120, %cst_88 {dimension_numbers = #tpu.dot_dimension_numbers<[1], [0], [0], [1], [0, 0, 1, 1], [], []>} : vector<8x4xf32>, vector<4x128xf32>, vector<8x128xf32> -> vector<8x128xf32>
    %124 = arith.addf %72, %123 : vector<8x128xf32>
    %cst_89 = arith.constant 0.000000e+00 : f32
    %125 = vector.broadcast %cst_89 : f32 to vector<8x128xf32>
    %126 = arith.subf %125, %123 : vector<8x128xf32>
    %127 = arith.addf %71, %126 : vector<8x128xf32>
    %cst_90 = arith.constant 0.000000e+00 : f32
    %128 = vector.broadcast %cst_90 : f32 to vector<4x128xf32>
    %129 = arith.subf %128, %99 : vector<4x128xf32>
    %130 = arith.addf %89, %129 : vector<4x128xf32>
    %c11 = arith.constant 11 : index
    %c0_91 = arith.constant 0 : index
    %c0_92 = arith.constant 0 : index
    %131 = vector.load %arg3[%c11, %c0_91, %c0_92] : memref<16x8x4xf32, #tpu.memory_space<vmem>>, vector<1x8x4xf32>
    %132 = vector.shape_cast %131 : vector<1x8x4xf32> to vector<8x4xf32>
    %cst_93 = arith.constant dense<0.000000e+00> : vector<8x128xf32>
    %133 = tpu.matmul %132, %130, %cst_93 {dimension_numbers = #tpu.dot_dimension_numbers<[1], [0], [0], [1], [0, 0, 1, 1], [], []>} : vector<8x4xf32>, vector<4x128xf32>, vector<8x128xf32> -> vector<8x128xf32>
    %134 = arith.addf %79, %133 : vector<8x128xf32>
    %cst_94 = arith.constant 0.000000e+00 : f32
    %135 = vector.broadcast %cst_94 : f32 to vector<8x128xf32>
    %136 = arith.subf %135, %133 : vector<8x128xf32>
    %137 = arith.addf %78, %136 : vector<8x128xf32>
    %c16_95 = arith.constant 16 : index
    %c0_96 = arith.constant 0 : index
    %138 = vector.load %arg2[%c16_95, %c0_96] : memref<64x128xf32, #tpu.memory_space<vmem>>, vector<4x128xf32>
    %c48 = arith.constant 48 : index
    %c0_97 = arith.constant 0 : index
    %139 = vector.load %arg2[%c48, %c0_97] : memref<64x128xf32, #tpu.memory_space<vmem>>, vector<4x128xf32>
    %cst_98 = arith.constant 0.000000e+00 : f32
    %140 = vector.broadcast %cst_98 : f32 to vector<4x128xf32>
    %141 = arith.subf %140, %139 : vector<4x128xf32>
    %142 = arith.addf %138, %141 : vector<4x128xf32>
    %c20_99 = arith.constant 20 : index
    %c0_100 = arith.constant 0 : index
    %143 = vector.load %arg2[%c20_99, %c0_100] : memref<64x128xf32, #tpu.memory_space<vmem>>, vector<4x128xf32>
    %c52 = arith.constant 52 : index
    %c0_101 = arith.constant 0 : index
    %144 = vector.load %arg2[%c52, %c0_101] : memref<64x128xf32, #tpu.memory_space<vmem>>, vector<4x128xf32>
    %cst_102 = arith.constant 0.000000e+00 : f32
    %145 = vector.broadcast %cst_102 : f32 to vector<4x128xf32>
    %146 = arith.subf %145, %144 : vector<4x128xf32>
    %147 = arith.addf %143, %146 : vector<4x128xf32>
    %c24_103 = arith.constant 24 : index
    %c0_104 = arith.constant 0 : index
    %148 = vector.load %arg2[%c24_103, %c0_104] : memref<64x128xf32, #tpu.memory_space<vmem>>, vector<4x128xf32>
    %c56 = arith.constant 56 : index
    %c0_105 = arith.constant 0 : index
    %149 = vector.load %arg2[%c56, %c0_105] : memref<64x128xf32, #tpu.memory_space<vmem>>, vector<4x128xf32>
    %cst_106 = arith.constant 0.000000e+00 : f32
    %150 = vector.broadcast %cst_106 : f32 to vector<4x128xf32>
    %151 = arith.subf %150, %149 : vector<4x128xf32>
    %152 = arith.addf %148, %151 : vector<4x128xf32>
    %c28_107 = arith.constant 28 : index
    %c0_108 = arith.constant 0 : index
    %153 = vector.load %arg2[%c28_107, %c0_108] : memref<64x128xf32, #tpu.memory_space<vmem>>, vector<4x128xf32>
    %c60 = arith.constant 60 : index
    %c0_109 = arith.constant 0 : index
    %154 = vector.load %arg2[%c60, %c0_109] : memref<64x128xf32, #tpu.memory_space<vmem>>, vector<4x128xf32>
    %cst_110 = arith.constant 0.000000e+00 : f32
    %155 = vector.broadcast %cst_110 : f32 to vector<4x128xf32>
    %156 = arith.subf %155, %154 : vector<4x128xf32>
    %157 = arith.addf %153, %156 : vector<4x128xf32>
    %cst_111 = arith.constant 0.000000e+00 : f32
    %158 = vector.broadcast %cst_111 : f32 to vector<4x128xf32>
    %159 = arith.subf %158, %152 : vector<4x128xf32>
    %160 = arith.addf %142, %159 : vector<4x128xf32>
    %c12_112 = arith.constant 12 : index
    %c0_113 = arith.constant 0 : index
    %c0_114 = arith.constant 0 : index
    %161 = vector.load %arg3[%c12_112, %c0_113, %c0_114] : memref<16x8x4xf32, #tpu.memory_space<vmem>>, vector<1x8x4xf32>
    %162 = vector.shape_cast %161 : vector<1x8x4xf32> to vector<8x4xf32>
    %cst_115 = arith.constant dense<0.000000e+00> : vector<8x128xf32>
    %163 = tpu.matmul %162, %160, %cst_115 {dimension_numbers = #tpu.dot_dimension_numbers<[1], [0], [0], [1], [0, 0, 1, 1], [], []>} : vector<8x4xf32>, vector<4x128xf32>, vector<8x128xf32> -> vector<8x128xf32>
    %cst_116 = arith.constant 0.000000e+00 : f32
    %164 = vector.broadcast %cst_116 : f32 to vector<8x128xf32>
    %165 = arith.subf %164, %163 : vector<8x128xf32>
    %166 = arith.addf %109, %165 : vector<8x128xf32>
    %167 = arith.addf %147, %152 : vector<4x128xf32>
    %c13 = arith.constant 13 : index
    %c0_117 = arith.constant 0 : index
    %c0_118 = arith.constant 0 : index
    %168 = vector.load %arg3[%c13, %c0_117, %c0_118] : memref<16x8x4xf32, #tpu.memory_space<vmem>>, vector<1x8x4xf32>
    %169 = vector.shape_cast %168 : vector<1x8x4xf32> to vector<8x4xf32>
    %cst_119 = arith.constant dense<0.000000e+00> : vector<8x128xf32>
    %170 = tpu.matmul %169, %167, %cst_119 {dimension_numbers = #tpu.dot_dimension_numbers<[1], [0], [0], [1], [0, 0, 1, 1], [], []>} : vector<8x4xf32>, vector<4x128xf32>, vector<8x128xf32> -> vector<8x128xf32>
    %cst_120 = arith.constant 0.000000e+00 : f32
    %171 = vector.broadcast %cst_120 : f32 to vector<8x128xf32>
    %172 = arith.subf %171, %170 : vector<8x128xf32>
    %173 = arith.addf %117, %172 : vector<8x128xf32>
    %cst_121 = arith.constant 0.000000e+00 : f32
    %174 = vector.broadcast %cst_121 : f32 to vector<4x128xf32>
    %175 = arith.subf %174, %147 : vector<4x128xf32>
    %176 = arith.addf %175, %152 : vector<4x128xf32>
    %c14 = arith.constant 14 : index
    %c0_122 = arith.constant 0 : index
    %c0_123 = arith.constant 0 : index
    %177 = vector.load %arg3[%c14, %c0_122, %c0_123] : memref<16x8x4xf32, #tpu.memory_space<vmem>>, vector<1x8x4xf32>
    %178 = vector.shape_cast %177 : vector<1x8x4xf32> to vector<8x4xf32>
    %cst_124 = arith.constant dense<0.000000e+00> : vector<8x128xf32>
    %179 = tpu.matmul %178, %176, %cst_124 {dimension_numbers = #tpu.dot_dimension_numbers<[1], [0], [0], [1], [0, 0, 1, 1], [], []>} : vector<8x4xf32>, vector<4x128xf32>, vector<8x128xf32> -> vector<8x128xf32>
    %cst_125 = arith.constant 0.000000e+00 : f32
    %180 = vector.broadcast %cst_125 : f32 to vector<8x128xf32>
    %181 = arith.subf %180, %179 : vector<8x128xf32>
    %182 = arith.addf %127, %181 : vector<8x128xf32>
    %cst_126 = arith.constant 0.000000e+00 : f32
    %183 = vector.broadcast %cst_126 : f32 to vector<4x128xf32>
    %184 = arith.subf %183, %157 : vector<4x128xf32>
    %185 = arith.addf %147, %184 : vector<4x128xf32>
    %c15 = arith.constant 15 : index
    %c0_127 = arith.constant 0 : index
    %c0_128 = arith.constant 0 : index
    %186 = vector.load %arg3[%c15, %c0_127, %c0_128] : memref<16x8x4xf32, #tpu.memory_space<vmem>>, vector<1x8x4xf32>
    %187 = vector.shape_cast %186 : vector<1x8x4xf32> to vector<8x4xf32>
    %cst_129 = arith.constant dense<0.000000e+00> : vector<8x128xf32>
    %188 = tpu.matmul %187, %185, %cst_129 {dimension_numbers = #tpu.dot_dimension_numbers<[1], [0], [0], [1], [0, 0, 1, 1], [], []>} : vector<8x4xf32>, vector<4x128xf32>, vector<8x128xf32> -> vector<8x128xf32>
    %cst_130 = arith.constant 0.000000e+00 : f32
    %189 = vector.broadcast %cst_130 : f32 to vector<8x128xf32>
    %190 = arith.subf %189, %188 : vector<8x128xf32>
    %191 = arith.addf %137, %190 : vector<8x128xf32>
    %192 = arith.addf %106, %114 : vector<8x128xf32>
    %193 = arith.addf %192, %124 : vector<8x128xf32>
    %c0_131 = arith.constant 0 : index
    %c0_132 = arith.constant 0 : index
    %c0_133 = arith.constant 0 : index
    %194 = vector.load %arg4[%c0_131, %c0_132, %c0_133] : memref<4x8x128xf32, #tpu.memory_space<vmem>>, vector<1x8x128xf32>
    %195 = vector.shape_cast %194 : vector<1x8x128xf32> to vector<8x128xf32>
    %196 = vector.shape_cast %193 : vector<8x128xf32> to vector<1x8x128xf32>
    tpu.vector_store %arg4[%c0_131, %c0_132, %c0_133], %196 {strides = array<i32>} : memref<4x8x128xf32, #tpu.memory_space<vmem>>, vector<1x8x128xf32>,
    %cst_134 = arith.constant 0.000000e+00 : f32
    %197 = vector.broadcast %cst_134 : f32 to vector<8x128xf32>
    %198 = arith.subf %197, %124 : vector<8x128xf32>
    %199 = arith.addf %114, %198 : vector<8x128xf32>
    %cst_135 = arith.constant 0.000000e+00 : f32
    %200 = vector.broadcast %cst_135 : f32 to vector<8x128xf32>
    %201 = arith.subf %200, %134 : vector<8x128xf32>
    %202 = arith.addf %199, %201 : vector<8x128xf32>
    %c1_136 = arith.constant 1 : index
    %c0_137 = arith.constant 0 : index
    %c0_138 = arith.constant 0 : index
    %203 = vector.load %arg4[%c1_136, %c0_137, %c0_138] : memref<4x8x128xf32, #tpu.memory_space<vmem>>, vector<1x8x128xf32>
    %204 = vector.shape_cast %203 : vector<1x8x128xf32> to vector<8x128xf32>
    %205 = vector.shape_cast %202 : vector<8x128xf32> to vector<1x8x128xf32>
    tpu.vector_store %arg4[%c1_136, %c0_137, %c0_138], %205 {strides = array<i32>} : memref<4x8x128xf32, #tpu.memory_space<vmem>>, vector<1x8x128xf32>,
    %206 = arith.addf %166, %173 : vector<8x128xf32>
    %207 = arith.addf %206, %182 : vector<8x128xf32>
    %c2_139 = arith.constant 2 : index
    %c0_140 = arith.constant 0 : index
    %c0_141 = arith.constant 0 : index
    %208 = vector.load %arg4[%c2_139, %c0_140, %c0_141] : memref<4x8x128xf32, #tpu.memory_space<vmem>>, vector<1x8x128xf32>
    %209 = vector.shape_cast %208 : vector<1x8x128xf32> to vector<8x128xf32>
    %210 = vector.shape_cast %207 : vector<8x128xf32> to vector<1x8x128xf32>
    tpu.vector_store %arg4[%c2_139, %c0_140, %c0_141], %210 {strides = array<i32>} : memref<4x8x128xf32, #tpu.memory_space<vmem>>, vector<1x8x128xf32>,
    %cst_142 = arith.constant 0.000000e+00 : f32
    %211 = vector.broadcast %cst_142 : f32 to vector<8x128xf32>
    %212 = arith.subf %211, %182 : vector<8x128xf32>
    %213 = arith.addf %173, %212 : vector<8x128xf32>
    %cst_143 = arith.constant 0.000000e+00 : f32
    %214 = vector.broadcast %cst_143 : f32 to vector<8x128xf32>
    %215 = arith.subf %214, %191 : vector<8x128xf32>
    %216 = arith.addf %213, %215 : vector<8x128xf32>
    %c3_144 = arith.constant 3 : index
    %c0_145 = arith.constant 0 : index
    %c0_146 = arith.constant 0 : index
    %217 = vector.load %arg4[%c3_144, %c0_145, %c0_146] : memref<4x8x128xf32, #tpu.memory_space<vmem>>, vector<1x8x128xf32>
    %218 = vector.shape_cast %217 : vector<1x8x128xf32> to vector<8x128xf32>
    %219 = vector.shape_cast %216 : vector<8x128xf32> to vector<1x8x128xf32>
    tpu.vector_store %arg4[%c3_144, %c0_145, %c0_146], %219 {strides = array<i32>} : memref<4x8x128xf32, #tpu.memory_space<vmem>>, vector<1x8x128xf32>,
    return
  }
  func.func @transform_0(%arg0: i32, %arg1: i32) -> (i32, i32) {
    %c0_i32 = arith.constant 0 : i32
    %c0_i32_0 = arith.constant 0 : i32
    return %c0_i32, %arg0 : i32, i32
  }
  func.func @transform_1(%arg0: i32, %arg1: i32) -> (i32, i32, i32) {
    %c0_i32 = arith.constant 0 : i32
    %c0_i32_0 = arith.constant 0 : i32
    %c0_i32_1 = arith.constant 0 : i32
    return %c0_i32, %arg1, %c0_i32_0 : i32, i32, i32
  }
  func.func @transform_2(%arg0: i32, %arg1: i32) -> (i32, i32, i32) {
    %c0_i32 = arith.constant 0 : i32
    %c0_i32_0 = arith.constant 0 : i32
    return %c0_i32, %arg1, %arg0 : i32, i32, i32
  }
}

</mosaic_0001>

<llo_original>
// kernel: winograd_parall_forward.1
$region0: #{winograd_parall_forward.1}
  #allocation0 [shape = 'u32[]', space=smem, size = 0x4, offset = 0x4, fixed_abs, tag = 'smem constant byte address 0x4 - core index']
  #allocation1 [shape = 'u32[144,128]{1,0:T(1,128)}', space=vmem, size = 0x12000, scoped, tag = 'internal scratch']
  %s0 = inlined_call_operand.vmem [shape: f32[64,128], index: 0, kind: input, shape index: {}]
  %s1 = inlined_call_operand.vmem [shape: f32[16,8,4], index: 1, kind: input, shape index: {}]
  %s2 = inlined_call_operand.vmem [shape: f32[4,8,128], index: 2, kind: output, shape index: {}]
  %s3 = sld [smem:[#allocation0]]
  $region18: #{winograd_parall_forward.1} parent=0
    _
  %s5 = ssub.s32 1, %s3
  %s6 = scalar_select 0, %s5, %s3
  // Predicated region
  $region2: #{winograd_parall_forward.1} parent=0 // pred_check
    _
  $region3: #{winograd_parall_forward.1} parent=0 // pred_check_branch
    %8 = sbr.rel (0) target = $region5
  $region4: #{winograd_parall_forward.1} parent=0 // pred_region
    _
  $region5: #{winograd_parall_forward.1} parent=0 // pred_fallthru
    _
  // Predicated region
  $region6: #{winograd_parall_forward.1} parent=0 // pred_check
    _
  $region7: #{winograd_parall_forward.1} parent=0 // pred_check_branch
    %10 = sbr.rel (0) target = $region9
  $region8: #{winograd_parall_forward.1} parent=0 // pred_region
    _
  $region9: #{winograd_parall_forward.1} parent=0 // pred_fallthru
    _
  %v11 = vld [vmem:[%s0] sm:$0xf]
  %v12 = vld [vmem:[%s0 + $0x20] sm:$0xf]
  %v13 = vsub.f32 0.0, %v12
  %v14 = vadd.f32 %v11, %v13
  %v15 = vld [vmem:[%s0 + $0x4] sm:$0xf]
  %v16 = vld [vmem:[%s0 + $0x24] sm:$0xf]
  %v17 = vsub.f32 0.0, %v16
  %v18 = vadd.f32 %v15, %v17
  %v19 = vld [vmem:[%s0 + $0x8] sm:$0xf]
  %v20 = vld [vmem:[%s0 + $0x28] sm:$0xf]
  %v21 = vsub.f32 0.0, %v20
  %v22 = vadd.f32 %v19, %v21
  %v23 = vld [vmem:[%s0 + $0xc] sm:$0xf]
  %v24 = vld [vmem:[%s0 + $0x2c] sm:$0xf]
  %v25 = vsub.f32 0.0, %v24
  %v26 = vadd.f32 %v23, %v25
  %v27 = vsub.f32 0.0, %v22
  %v28 = vadd.f32 %v14, %v27
  %v29 = vld [vmem:[%s1] sm:$0xff]
  %v30 = vadd.f32 %v18, %v22
  %s31 = scalar_lea.vmem %s1, 8
  %v32 = vld [vmem:[%s31] sm:$0xff]
  %v33 = vsub.f32 0.0, %v18
  %v34 = vadd.f32 %v33, %v22
  %s35 = scalar_lea.vmem %s1, 16
  %v36 = vld [vmem:[%s35] sm:$0xff]
  %v37 = vsub.f32 0.0, %v26
  %v38 = vadd.f32 %v18, %v37
  %s39 = scalar_lea.vmem %s1, 24
  %v40 = vld [vmem:[%s39] sm:$0xff]
  %v41 = vld [vmem:[%s0 + $0x10] sm:$0xf]
  %v42 = vadd.f32 %v41, %v12
  %v43 = vld [vmem:[%s0 + $0x14] sm:$0xf]
  %v44 = vadd.f32 %v43, %v16
  %v45 = vld [vmem:[%s0 + $0x18] sm:$0xf]
  %v46 = vadd.f32 %v45, %v20
  %v47 = vld [vmem:[%s0 + $0x1c] sm:$0xf]
  %v48 = vadd.f32 %v47, %v24
  %v49 = vsub.f32 0.0, %v46
  %v50 = vadd.f32 %v42, %v49
  %s51 = scalar_lea.vmem %s1, 32
  %v52 = vld [vmem:[%s51] sm:$0xff]
  %vm53 = vcmask 31744
  %v55 = vsel %vm53, %v52, 0
  %vm57 = vcmask 1043456
  %v59 = vsel %vm57, %v50, 0
  %61 = vmatprep.subr.mxu0 0.0
  %62 = vmatpush1.msra.mxu0 %v59
  %63 = vmatprep.subr.mxu0 0.0
  %64 = vmatpush1.msra.mxu0 0.0
  %65 = vmatprep.subr.mxu0 0.0
  %66 = vmatpush1.msra.mxu0 0.0
  %67 = vmatprep.subr.mxu0 0.0
  %68 = vmatpush1.msra.mxu0 0.0
  %69 = vmatprep.subr.mxu0 0.0
  %70 = vmatpush1.msra.mxu0 0.0
  %71 = vmatprep.subr.mxu0 0.0
  %72 = vmatpush1.msra.mxu0 0.0
  %73 = vmatprep.subr.mxu0 0.0
  %74 = vmatpush1.msra.mxu0 0.0
  %75 = vmatprep.subr.mxu0 0.0
  %76 = vmatpush1.msra.mxu0 0.0
  %77 = vmatprep.subr.mxu0 0.0
  %78 = vmatpush1.msra.mxu0 0.0
  %79 = vmatprep.subr.mxu0 0.0
  %80 = vmatpush1.msra.mxu0 0.0
  %81 = vmatprep.subr.mxu0 0.0
  %82 = vmatpush1.msra.mxu0 0.0
  %83 = vmatprep.subr.mxu0 0.0
  %84 = vmatpush1.msra.mxu0 0.0
  %85 = vmatprep.subr.mxu0 0.0
  %86 = vmatpush1.msra.mxu0 0.0
  %87 = vmatprep.subr.mxu0 0.0
  %88 = vmatpush1.msra.mxu0 0.0
  %89 = vmatprep.subr.mxu0 0.0
  %90 = vmatpush1.msra.mxu0 0.0
  %91 = vmatprep.subr.mxu0 0.0
  %92 = vmatpush1.msra.mxu0 0.0
  %93 = vmatprep.subr.mxu0 0.0
  %94 = vmatpush1.msra.mxu0 0.0
  %95 = vmatprep.subr.mxu0 0.0
  %96 = vmatpush1.msra.mxu0 0.0
  %97 = vmatprep.subr.mxu0 0.0
  %98 = vmatpush1.msra.mxu0 0.0
  %99 = vmatprep.subr.mxu0 0.0
  %100 = vmatpush1.msra.mxu0 0.0
  %101 = vmatprep.subr.mxu0 0.0
  %102 = vmatpush1.msra.mxu0 0.0
  %103 = vmatprep.subr.mxu0 0.0
  %104 = vmatpush1.msra.mxu0 0.0
  %105 = vmatprep.subr.mxu0 0.0
  %106 = vmatpush1.msra.mxu0 0.0
  %107 = vmatprep.subr.mxu0 0.0
  %108 = vmatpush1.msra.mxu0 0.0
  %109 = vmatprep.subr.mxu0 0.0
  %110 = vmatpush1.msra.mxu0 0.0
  %111 = vmatprep.subr.mxu0 0.0
  %112 = vmatpush1.msra.mxu0 0.0
  %113 = vmatprep.subr.mxu0 0.0
  %114 = vmatpush1.msra.mxu0 0.0
  %115 = vmatprep.subr.mxu0 0.0
  %116 = vmatpush1.msra.mxu0 0.0
  %117 = vmatprep.subr.mxu0 0.0
  %118 = vmatpush1.msra.mxu0 0.0
  %119 = vmatprep.subr.mxu0 0.0
  %120 = vmatpush1.msra.mxu0 0.0
  %121 = vmatprep.subr.mxu0 0.0
  %122 = vmatpush1.msra.mxu0 0.0
  %123 = vmatprep.subr.mxu0 0.0
  %124 = vmatpush1.msra.mxu0 0.0
  %125 = vmatprep.mubr.f32.mxu0 0.0
  %126 = vmatmul.mubr.f32.gmra.mrb[0].mxu0 %v55
  %v127 = vpop.f32.mrb[0].mxu0
  %v128 = vadd.f32 0.0, %v127
  %v129 = vpop.f32.mrb[0].mxu0
  %130 = vdwg.mxu0
  %v132 = vsel %vm53, %v29, 0
  %v135 = vsel %vm57, %v28, 0
  %137 = vmatprep.subr.mxu0 0.0
  %138 = vmatpush1.msra.mxu0 %v135
  %139 = vmatprep.subr.mxu0 0.0
  %140 = vmatpush1.msra.mxu0 0.0
  %141 = vmatprep.subr.mxu0 0.0
  %142 = vmatpush1.msra.mxu0 0.0
  %143 = vmatprep.subr.mxu0 0.0
  %144 = vmatpush1.msra.mxu0 0.0
  %145 = vmatprep.subr.mxu0 0.0
  %146 = vmatpush1.msra.mxu0 0.0
  %147 = vmatprep.subr.mxu0 0.0
  %148 = vmatpush1.msra.mxu0 0.0
  %149 = vmatprep.subr.mxu0 0.0
  %150 = vmatpush1.msra.mxu0 0.0
  %151 = vmatprep.subr.mxu0 0.0
  %152 = vmatpush1.msra.mxu0 0.0
  %153 = vmatprep.subr.mxu0 0.0
  %154 = vmatpush1.msra.mxu0 0.0
  %155 = vmatprep.subr.mxu0 0.0
  %156 = vmatpush1.msra.mxu0 0.0
  %157 = vmatprep.subr.mxu0 0.0
  %158 = vmatpush1.msra.mxu0 0.0
  %159 = vmatprep.subr.mxu0 0.0
  %160 = vmatpush1.msra.mxu0 0.0
  %161 = vmatprep.subr.mxu0 0.0
  %162 = vmatpush1.msra.mxu0 0.0
  %163 = vmatprep.subr.mxu0 0.0
  %164 = vmatpush1.msra.mxu0 0.0
  %165 = vmatprep.subr.mxu0 0.0
  %166 = vmatpush1.msra.mxu0 0.0
  %167 = vmatprep.subr.mxu0 0.0
  %168 = vmatpush1.msra.mxu0 0.0
  %169 = vmatprep.subr.mxu0 0.0
  %170 = vmatpush1.msra.mxu0 0.0
  %171 = vmatprep.subr.mxu0 0.0
  %172 = vmatpush1.msra.mxu0 0.0
  %173 = vmatprep.subr.mxu0 0.0
  %174 = vmatpush1.msra.mxu0 0.0
  %175 = vmatprep.subr.mxu0 0.0
  %176 = vmatpush1.msra.mxu0 0.0
  %177 = vmatprep.subr.mxu0 0.0
  %178 = vmatpush1.msra.mxu0 0.0
  %179 = vmatprep.subr.mxu0 0.0
  %180 = vmatpush1.msra.mxu0 0.0
  %181 = vmatprep.subr.mxu0 0.0
  %182 = vmatpush1.msra.mxu0 0.0
  %183 = vmatprep.subr.mxu0 0.0
  %184 = vmatpush1.msra.mxu0 0.0
  %185 = vmatprep.subr.mxu0 0.0
  %186 = vmatpush1.msra.mxu0 0.0
  %187 = vmatprep.subr.mxu0 0.0
  %188 = vmatpush1.msra.mxu0 0.0
  %189 = vmatprep.subr.mxu0 0.0
  %190 = vmatpush1.msra.mxu0 0.0
  %191 = vmatprep.subr.mxu0 0.0
  %192 = vmatpush1.msra.mxu0 0.0
  %193 = vmatprep.subr.mxu0 0.0
  %194 = vmatpush1.msra.mxu0 0.0
  %195 = vmatprep.subr.mxu0 0.0
  %196 = vmatpush1.msra.mxu0 0.0
  %197 = vmatprep.subr.mxu0 0.0
  %198 = vmatpush1.msra.mxu0 0.0
  %199 = vmatprep.subr.mxu0 0.0
  %200 = vmatpush1.msra.mxu0 0.0
  %201 = vmatprep.mubr.f32.mxu0 0.0
  %202 = vmatmul.mubr.f32.gmra.mrb[0].mxu0 %v132
  %v203 = vpop.f32.mrb[0].mxu0
  %v204 = vadd.f32 %v128, %v203
  %v205 = vpop.f32.mrb[0].mxu0
  %206 = vdwg.mxu0
  %v207 = vadd.f32 %v44, %v46
  %s208 = scalar_lea.vmem %s1, 40
  %v209 = vld [vmem:[%s208] sm:$0xff]
  %v211 = vsel %vm53, %v209, 0
  %v214 = vsel %vm57, %v207, 0
  %216 = vmatprep.subr.mxu0 0.0
  %217 = vmatpush1.msra.mxu0 %v214
  %218 = vmatprep.subr.mxu0 0.0
  %219 = vmatpush1.msra.mxu0 0.0
  %220 = vmatprep.subr.mxu0 0.0
  %221 = vmatpush1.msra.mxu0 0.0
  %222 = vmatprep.subr.mxu0 0.0
  %223 = vmatpush1.msra.mxu0 0.0
  %224 = vmatprep.subr.mxu0 0.0
  %225 = vmatpush1.msra.mxu0 0.0
  %226 = vmatprep.subr.mxu0 0.0
  %227 = vmatpush1.msra.mxu0 0.0
  %228 = vmatprep.subr.mxu0 0.0
  %229 = vmatpush1.msra.mxu0 0.0
  %230 = vmatprep.subr.mxu0 0.0
  %231 = vmatpush1.msra.mxu0 0.0
  %232 = vmatprep.subr.mxu0 0.0
  %233 = vmatpush1.msra.mxu0 0.0
  %234 = vmatprep.subr.mxu0 0.0
  %235 = vmatpush1.msra.mxu0 0.0
  %236 = vmatprep.subr.mxu0 0.0
  %237 = vmatpush1.msra.mxu0 0.0
  %238 = vmatprep.subr.mxu0 0.0
  %239 = vmatpush1.msra.mxu0 0.0
  %240 = vmatprep.subr.mxu0 0.0
  %241 = vmatpush1.msra.mxu0 0.0
  %242 = vmatprep.subr.mxu0 0.0
  %243 = vmatpush1.msra.mxu0 0.0
  %244 = vmatprep.subr.mxu0 0.0
  %245 = vmatpush1.msra.mxu0 0.0
  %246 = vmatprep.subr.mxu0 0.0
  %247 = vmatpush1.msra.mxu0 0.0
  %248 = vmatprep.subr.mxu0 0.0
  %249 = vmatpush1.msra.mxu0 0.0
  %250 = vmatprep.subr.mxu0 0.0
  %251 = vmatpush1.msra.mxu0 0.0
  %252 = vmatprep.subr.mxu0 0.0
  %253 = vmatpush1.msra.mxu0 0.0
  %254 = vmatprep.subr.mxu0 0.0
  %255 = vmatpush1.msra.mxu0 0.0
  %256 = vmatprep.subr.mxu0 0.0
  %257 = vmatpush1.msra.mxu0 0.0
  %258 = vmatprep.subr.mxu0 0.0
  %259 = vmatpush1.msra.mxu0 0.0
  %260 = vmatprep.subr.mxu0 0.0
  %261 = vmatpush1.msra.mxu0 0.0
  %262 = vmatprep.subr.mxu0 0.0
  %263 = vmatpush1.msra.mxu0 0.0
  %264 = vmatprep.subr.mxu0 0.0
  %265 = vmatpush1.msra.mxu0 0.0
  %266 = vmatprep.subr.mxu0 0.0
  %267 = vmatpush1.msra.mxu0 0.0
  %268 = vmatprep.subr.mxu0 0.0
  %269 = vmatpush1.msra.mxu0 0.0
  %270 = vmatprep.subr.mxu0 0.0
  %271 = vmatpush1.msra.mxu0 0.0
  %272 = vmatprep.subr.mxu0 0.0
  %273 = vmatpush1.msra.mxu0 0.0
  %274 = vmatprep.subr.mxu0 0.0
  %275 = vmatpush1.msra.mxu0 0.0
  %276 = vmatprep.subr.mxu0 0.0
  %277 = vmatpush1.msra.mxu0 0.0
  %278 = vmatprep.subr.mxu0 0.0
  %279 = vmatpush1.msra.mxu0 0.0
  %280 = vmatprep.mubr.f32.mxu0 0.0
  %281 = vmatmul.mubr.f32.gmra.mrb[0].mxu0 %v211
  %v282 = vpop.f32.mrb[0].mxu0
  %v283 = vadd.f32 0.0, %v282
  %v284 = vpop.f32.mrb[0].mxu0
  %285 = vdwg.mxu0
  %v287 = vsel %vm53, %v32, 0
  %v290 = vsel %vm57, %v30, 0
  %292 = vmatprep.subr.mxu0 0.0
  %293 = vmatpush1.msra.mxu0 %v290
  %294 = vmatprep.subr.mxu0 0.0
  %295 = vmatpush1.msra.mxu0 0.0
  %296 = vmatprep.subr.mxu0 0.0
  %297 = vmatpush1.msra.mxu0 0.0
  %298 = vmatprep.subr.mxu0 0.0
  %299 = vmatpush1.msra.mxu0 0.0
  %300 = vmatprep.subr.mxu0 0.0
  %301 = vmatpush1.msra.mxu0 0.0
  %302 = vmatprep.subr.mxu0 0.0
  %303 = vmatpush1.msra.mxu0 0.0
  %304 = vmatprep.subr.mxu0 0.0
  %305 = vmatpush1.msra.mxu0 0.0
  %306 = vmatprep.subr.mxu0 0.0
  %307 = vmatpush1.msra.mxu0 0.0
  %308 = vmatprep.subr.mxu0 0.0
  %309 = vmatpush1.msra.mxu0 0.0
  %310 = vmatprep.subr.mxu0 0.0
  %311 = vmatpush1.msra.mxu0 0.0
  %312 = vmatprep.subr.mxu0 0.0
  %313 = vmatpush1.msra.mxu0 0.0
  %314 = vmatprep.subr.mxu0 0.0
  %315 = vmatpush1.msra.mxu0 0.0
  %316 = vmatprep.subr.mxu0 0.0
  %317 = vmatpush1.msra.mxu0 0.0
  %318 = vmatprep.subr.mxu0 0.0
  %319 = vmatpush1.msra.mxu0 0.0
  %320 = vmatprep.subr.mxu0 0.0
  %321 = vmatpush1.msra.mxu0 0.0
  %322 = vmatprep.subr.mxu0 0.0
  %323 = vmatpush1.msra.mxu0 0.0
  %324 = vmatprep.subr.mxu0 0.0
  %325 = vmatpush1.msra.mxu0 0.0
  %326 = vmatprep.subr.mxu0 0.0
  %327 = vmatpush1.msra.mxu0 0.0
  %328 = vmatprep.subr.mxu0 0.0
  %329 = vmatpush1.msra.mxu0 0.0
  %330 = vmatprep.subr.mxu0 0.0
  %331 = vmatpush1.msra.mxu0 0.0
  %332 = vmatprep.subr.mxu0 0.0
  %333 = vmatpush1.msra.mxu0 0.0
  %334 = vmatprep.subr.mxu0 0.0
  %335 = vmatpush1.msra.mxu0 0.0
  %336 = vmatprep.subr.mxu0 0.0
  %337 = vmatpush1.msra.mxu0 0.0
  %338 = vmatprep.subr.mxu0 0.0
  %339 = vmatpush1.msra.mxu0 0.0
  %340 = vmatprep.subr.mxu0 0.0
  %341 = vmatpush1.msra.mxu0 0.0
  %342 = vmatprep.subr.mxu0 0.0
  %343 = vmatpush1.msra.mxu0 0.0
  %344 = vmatprep.subr.mxu0 0.0
  %345 = vmatpush1.msra.mxu0 0.0
  %346 = vmatprep.subr.mxu0 0.0
  %347 = vmatpush1.msra.mxu0 0.0
  %348 = vmatprep.subr.mxu0 0.0
  %349 = vmatpush1.msra.mxu0 0.0
  %350 = vmatprep.subr.mxu0 0.0
  %351 = vmatpush1.msra.mxu0 0.0
  %352 = vmatprep.subr.mxu0 0.0
  %353 = vmatpush1.msra.mxu0 0.0
  %354 = vmatprep.subr.mxu0 0.0
  %355 = vmatpush1.msra.mxu0 0.0
  %356 = vmatprep.mubr.f32.mxu0 0.0
  %357 = vmatmul.mubr.f32.gmra.mrb[0].mxu0 %v287
  %v358 = vpop.f32.mrb[0].mxu0
  %v359 = vadd.f32 %v283, %v358
  %v360 = vpop.f32.mrb[0].mxu0
  %361 = vdwg.mxu0
  %v362 = vsub.f32 0.0, %v44
  %v363 = vadd.f32 %v362, %v46
  %s364 = scalar_lea.vmem %s1, 48
  %v365 = vld [vmem:[%s364] sm:$0xff]
  %v367 = vsel %vm53, %v365, 0
  %v370 = vsel %vm57, %v363, 0
  %372 = vmatprep.subr.mxu0 0.0
  %373 = vmatpush1.msra.mxu0 %v370
  %374 = vmatprep.subr.mxu0 0.0
  %375 = vmatpush1.msra.mxu0 0.0
  %376 = vmatprep.subr.mxu0 0.0
  %377 = vmatpush1.msra.mxu0 0.0
  %378 = vmatprep.subr.mxu0 0.0
  %379 = vmatpush1.msra.mxu0 0.0
  %380 = vmatprep.subr.mxu0 0.0
  %381 = vmatpush1.msra.mxu0 0.0
  %382 = vmatprep.subr.mxu0 0.0
  %383 = vmatpush1.msra.mxu0 0.0
  %384 = vmatprep.subr.mxu0 0.0
  %385 = vmatpush1.msra.mxu0 0.0
  %386 = vmatprep.subr.mxu0 0.0
  %387 = vmatpush1.msra.mxu0 0.0
  %388 = vmatprep.subr.mxu0 0.0
  %389 = vmatpush1.msra.mxu0 0.0
  %390 = vmatprep.subr.mxu0 0.0
  %391 = vmatpush1.msra.mxu0 0.0
  %392 = vmatprep.subr.mxu0 0.0
  %393 = vmatpush1.msra.mxu0 0.0
  %394 = vmatprep.subr.mxu0 0.0
  %395 = vmatpush1.msra.mxu0 0.0
  %396 = vmatprep.subr.mxu0 0.0
  %397 = vmatpush1.msra.mxu0 0.0
  %398 = vmatprep.subr.mxu0 0.0
  %399 = vmatpush1.msra.mxu0 0.0
  %400 = vmatprep.subr.mxu0 0.0
  %401 = vmatpush1.msra.mxu0 0.0
  %402 = vmatprep.subr.mxu0 0.0
  %403 = vmatpush1.msra.mxu0 0.0
  %404 = vmatprep.subr.mxu0 0.0
  %405 = vmatpush1.msra.mxu0 0.0
  %406 = vmatprep.subr.mxu0 0.0
  %407 = vmatpush1.msra.mxu0 0.0
  %408 = vmatprep.subr.mxu0 0.0
  %409 = vmatpush1.msra.mxu0 0.0
  %410 = vmatprep.subr.mxu0 0.0
  %411 = vmatpush1.msra.mxu0 0.0
  %412 = vmatprep.subr.mxu0 0.0
  %413 = vmatpush1.msra.mxu0 0.0
  %414 = vmatprep.subr.mxu0 0.0
  %415 = vmatpush1.msra.mxu0 0.0
  %416 = vmatprep.subr.mxu0 0.0
  %417 = vmatpush1.msra.mxu0 0.0
  %418 = vmatprep.subr.mxu0 0.0
  %419 = vmatpush1.msra.mxu0 0.0
  %420 = vmatprep.subr.mxu0 0.0
  %421 = vmatpush1.msra.mxu0 0.0
  %422 = vmatprep.subr.mxu0 0.0
  %423 = vmatpush1.msra.mxu0 0.0
  %424 = vmatprep.subr.mxu0 0.0
  %425 = vmatpush1.msra.mxu0 0.0
  %426 = vmatprep.subr.mxu0 0.0
  %427 = vmatpush1.msra.mxu0 0.0
  %428 = vmatprep.subr.mxu0 0.0
  %429 = vmatpush1.msra.mxu0 0.0
  %430 = vmatprep.subr.mxu0 0.0
  %431 = vmatpush1.msra.mxu0 0.0
  %432 = vmatprep.subr.mxu0 0.0
  %433 = vmatpush1.msra.mxu0 0.0
  %434 = vmatprep.subr.mxu0 0.0
  %435 = vmatpush1.msra.mxu0 0.0
  %436 = vmatprep.mubr.f32.mxu0 0.0
  %437 = vmatmul.mubr.f32.gmra.mrb[0].mxu0 %v367
  %v438 = vpop.f32.mrb[0].mxu0
  %v439 = vadd.f32 0.0, %v438
  %v440 = vpop.f32.mrb[0].mxu0
  %441 = vdwg.mxu0
  %v443 = vsel %vm53, %v36, 0
  %v446 = vsel %vm57, %v34, 0
  %448 = vmatprep.subr.mxu0 0.0
  %449 = vmatpush1.msra.mxu0 %v446
  %450 = vmatprep.subr.mxu0 0.0
  %451 = vmatpush1.msra.mxu0 0.0
  %452 = vmatprep.subr.mxu0 0.0
  %453 = vmatpush1.msra.mxu0 0.0
  %454 = vmatprep.subr.mxu0 0.0
  %455 = vmatpush1.msra.mxu0 0.0
  %456 = vmatprep.subr.mxu0 0.0
  %457 = vmatpush1.msra.mxu0 0.0
  %458 = vmatprep.subr.mxu0 0.0
  %459 = vmatpush1.msra.mxu0 0.0
  %460 = vmatprep.subr.mxu0 0.0
  %461 = vmatpush1.msra.mxu0 0.0
  %462 = vmatprep.subr.mxu0 0.0
  %463 = vmatpush1.msra.mxu0 0.0
  %464 = vmatprep.subr.mxu0 0.0
  %465 = vmatpush1.msra.mxu0 0.0
  %466 = vmatprep.subr.mxu0 0.0
  %467 = vmatpush1.msra.mxu0 0.0
  %468 = vmatprep.subr.mxu0 0.0
  %469 = vmatpush1.msra.mxu0 0.0
  %470 = vmatprep.subr.mxu0 0.0
  %471 = vmatpush1.msra.mxu0 0.0
  %472 = vmatprep.subr.mxu0 0.0
  %473 = vmatpush1.msra.mxu0 0.0
  %474 = vmatprep.subr.mxu0 0.0
  %475 = vmatpush1.msra.mxu0 0.0
  %476 = vmatprep.subr.mxu0 0.0
  %477 = vmatpush1.msra.mxu0 0.0
  %478 = vmatprep.subr.mxu0 0.0
  %479 = vmatpush1.msra.mxu0 0.0
  %480 = vmatprep.subr.mxu0 0.0
  %481 = vmatpush1.msra.mxu0 0.0
  %482 = vmatprep.subr.mxu0 0.0
  %483 = vmatpush1.msra.mxu0 0.0
  %484 = vmatprep.subr.mxu0 0.0
  %485 = vmatpush1.msra.mxu0 0.0
  %486 = vmatprep.subr.mxu0 0.0
  %487 = vmatpush1.msra.mxu0 0.0
  %488 = vmatprep.subr.mxu0 0.0
  %489 = vmatpush1.msra.mxu0 0.0
  %490 = vmatprep.subr.mxu0 0.0
  %491 = vmatpush1.msra.mxu0 0.0
  %492 = vmatprep.subr.mxu0 0.0
  %493 = vmatpush1.msra.mxu0 0.0
  %494 = vmatprep.subr.mxu0 0.0
  %495 = vmatpush1.msra.mxu0 0.0
  %496 = vmatprep.subr.mxu0 0.0
  %497 = vmatpush1.msra.mxu0 0.0
  %498 = vmatprep.subr.mxu0 0.0
  %499 = vmatpush1.msra.mxu0 0.0
  %500 = vmatprep.subr.mxu0 0.0
  %501 = vmatpush1.msra.mxu0 0.0
  %502 = vmatprep.subr.mxu0 0.0
  %503 = vmatpush1.msra.mxu0 0.0
  %504 = vmatprep.subr.mxu0 0.0
  %505 = vmatpush1.msra.mxu0 0.0
  %506 = vmatprep.subr.mxu0 0.0
  %507 = vmatpush1.msra.mxu0 0.0
  %508 = vmatprep.subr.mxu0 0.0
  %509 = vmatpush1.msra.mxu0 0.0
  %510 = vmatprep.subr.mxu0 0.0
  %511 = vmatpush1.msra.mxu0 0.0
  %512 = vmatprep.mubr.f32.mxu0 0.0
  %513 = vmatmul.mubr.f32.gmra.mrb[0].mxu0 %v443
  %v514 = vpop.f32.mrb[0].mxu0
  %v515 = vadd.f32 %v439, %v514
  %v516 = vpop.f32.mrb[0].mxu0
  %517 = vdwg.mxu0
  %v518 = vsub.f32 0.0, %v48
  %v519 = vadd.f32 %v44, %v518
  %s520 = scalar_lea.vmem %s1, 56
  %v521 = vld [vmem:[%s520] sm:$0xff]
  %v523 = vsel %vm53, %v521, 0
  %v526 = vsel %vm57, %v519, 0
  %528 = vmatprep.subr.mxu0 0.0
  %529 = vmatpush1.msra.mxu0 %v526
  %530 = vmatprep.subr.mxu0 0.0
  %531 = vmatpush1.msra.mxu0 0.0
  %532 = vmatprep.subr.mxu0 0.0
  %533 = vmatpush1.msra.mxu0 0.0
  %534 = vmatprep.subr.mxu0 0.0
  %535 = vmatpush1.msra.mxu0 0.0
  %536 = vmatprep.subr.mxu0 0.0
  %537 = vmatpush1.msra.mxu0 0.0
  %538 = vmatprep.subr.mxu0 0.0
  %539 = vmatpush1.msra.mxu0 0.0
  %540 = vmatprep.subr.mxu0 0.0
  %541 = vmatpush1.msra.mxu0 0.0
  %542 = vmatprep.subr.mxu0 0.0
  %543 = vmatpush1.msra.mxu0 0.0
  %544 = vmatprep.subr.mxu0 0.0
  %545 = vmatpush1.msra.mxu0 0.0
  %546 = vmatprep.subr.mxu0 0.0
  %547 = vmatpush1.msra.mxu0 0.0
  %548 = vmatprep.subr.mxu0 0.0
  %549 = vmatpush1.msra.mxu0 0.0
  %550 = vmatprep.subr.mxu0 0.0
  %551 = vmatpush1.msra.mxu0 0.0
  %552 = vmatprep.subr.mxu0 0.0
  %553 = vmatpush1.msra.mxu0 0.0
  %554 = vmatprep.subr.mxu0 0.0
  %555 = vmatpush1.msra.mxu0 0.0
  %556 = vmatprep.subr.mxu0 0.0
  %557 = vmatpush1.msra.mxu0 0.0
  %558 = vmatprep.subr.mxu0 0.0
  %559 = vmatpush1.msra.mxu0 0.0
  %560 = vmatprep.subr.mxu0 0.0
  %561 = vmatpush1.msra.mxu0 0.0
  %562 = vmatprep.subr.mxu0 0.0
  %563 = vmatpush1.msra.mxu0 0.0
  %564 = vmatprep.subr.mxu0 0.0
  %565 = vmatpush1.msra.mxu0 0.0
  %566 = vmatprep.subr.mxu0 0.0
  %567 = vmatpush1.msra.mxu0 0.0
  %568 = vmatprep.subr.mxu0 0.0
  %569 = vmatpush1.msra.mxu0 0.0
  %570 = vmatprep.subr.mxu0 0.0
  %571 = vmatpush1.msra.mxu0 0.0
  %572 = vmatprep.subr.mxu0 0.0
  %573 = vmatpush1.msra.mxu0 0.0
  %574 = vmatprep.subr.mxu0 0.0
  %575 = vmatpush1.msra.mxu0 0.0
  %576 = vmatprep.subr.mxu0 0.0
  %577 = vmatpush1.msra.mxu0 0.0
  %578 = vmatprep.subr.mxu0 0.0
  %579 = vmatpush1.msra.mxu0 0.0
  %580 = vmatprep.subr.mxu0 0.0
  %581 = vmatpush1.msra.mxu0 0.0
  %582 = vmatprep.subr.mxu0 0.0
  %583 = vmatpush1.msra.mxu0 0.0
  %584 = vmatprep.subr.mxu0 0.0
  %585 = vmatpush1.msra.mxu0 0.0
  %586 = vmatprep.subr.mxu0 0.0
  %587 = vmatpush1.msra.mxu0 0.0
  %588 = vmatprep.subr.mxu0 0.0
  %589 = vmatpush1.msra.mxu0 0.0
  %590 = vmatprep.subr.mxu0 0.0
  %591 = vmatpush1.msra.mxu0 0.0
  %592 = vmatprep.mubr.f32.mxu0 0.0
  %593 = vmatmul.mubr.f32.gmra.mrb[0].mxu0 %v523
  %v594 = vpop.f32.mrb[0].mxu0
  %v595 = vadd.f32 0.0, %v594
  %v596 = vpop.f32.mrb[0].mxu0
  %597 = vdwg.mxu0
  %v599 = vsel %vm53, %v40, 0
  %v602 = vsel %vm57, %v38, 0
  %604 = vmatprep.subr.mxu0 0.0
  %605 = vmatpush1.msra.mxu0 %v602
  %606 = vmatprep.subr.mxu0 0.0
  %607 = vmatpush1.msra.mxu0 0.0
  %608 = vmatprep.subr.mxu0 0.0
  %609 = vmatpush1.msra.mxu0 0.0
  %610 = vmatprep.subr.mxu0 0.0
  %611 = vmatpush1.msra.mxu0 0.0
  %612 = vmatprep.subr.mxu0 0.0
  %613 = vmatpush1.msra.mxu0 0.0
  %614 = vmatprep.subr.mxu0 0.0
  %615 = vmatpush1.msra.mxu0 0.0
  %616 = vmatprep.subr.mxu0 0.0
  %617 = vmatpush1.msra.mxu0 0.0
  %618 = vmatprep.subr.mxu0 0.0
  %619 = vmatpush1.msra.mxu0 0.0
  %620 = vmatprep.subr.mxu0 0.0
  %621 = vmatpush1.msra.mxu0 0.0
  %622 = vmatprep.subr.mxu0 0.0
  %623 = vmatpush1.msra.mxu0 0.0
  %624 = vmatprep.subr.mxu0 0.0
  %625 = vmatpush1.msra.mxu0 0.0
  %626 = vmatprep.subr.mxu0 0.0
  %627 = vmatpush1.msra.mxu0 0.0
  %628 = vmatprep.subr.mxu0 0.0
  %629 = vmatpush1.msra.mxu0 0.0
  %630 = vmatprep.subr.mxu0 0.0
  %631 = vmatpush1.msra.mxu0 0.0
  %632 = vmatprep.subr.mxu0 0.0
  %633 = vmatpush1.msra.mxu0 0.0
  %634 = vmatprep.subr.mxu0 0.0
  %635 = vmatpush1.msra.mxu0 0.0
  %636 = vmatprep.subr.mxu0 0.0
  %637 = vmatpush1.msra.mxu0 0.0
  %638 = vmatprep.subr.mxu0 0.0
  %639 = vmatpush1.msra.mxu0 0.0
  %640 = vmatprep.subr.mxu0 0.0
  %641 = vmatpush1.msra.mxu0 0.0
  %642 = vmatprep.subr.mxu0 0.0
  %643 = vmatpush1.msra.mxu0 0.0
  %644 = vmatprep.subr.mxu0 0.0
  %645 = vmatpush1.msra.mxu0 0.0
  %646 = vmatprep.subr.mxu0 0.0
  %647 = vmatpush1.msra.mxu0 0.0
  %648 = vmatprep.subr.mxu0 0.0
  %649 = vmatpush1.msra.mxu0 0.0
  %650 = vmatprep.subr.mxu0 0.0
  %651 = vmatpush1.msra.mxu0 0.0
  %652 = vmatprep.subr.mxu0 0.0
  %653 = vmatpush1.msra.mxu0 0.0
  %654 = vmatprep.subr.mxu0 0.0
  %655 = vmatpush1.msra.mxu0 0.0
  %656 = vmatprep.subr.mxu0 0.0
  %657 = vmatpush1.msra.mxu0 0.0
  %658 = vmatprep.subr.mxu0 0.0
  %659 = vmatpush1.msra.mxu0 0.0
  %660 = vmatprep.subr.mxu0 0.0
  %661 = vmatpush1.msra.mxu0 0.0
  %662 = vmatprep.subr.mxu0 0.0
  %663 = vmatpush1.msra.mxu0 0.0
  %664 = vmatprep.subr.mxu0 0.0
  %665 = vmatpush1.msra.mxu0 0.0
  %666 = vmatprep.subr.mxu0 0.0
  %667 = vmatpush1.msra.mxu0 0.0
  %668 = vmatprep.mubr.f32.mxu0 0.0
  %669 = vmatmul.mubr.f32.gmra.mrb[0].mxu0 %v599
  %v670 = vpop.f32.mrb[0].mxu0
  %v671 = vadd.f32 %v595, %v670
  %v672 = vpop.f32.mrb[0].mxu0
  %673 = vdwg.mxu0
  %v674 = vsub.f32 0.0, %v41
  %v675 = vadd.f32 %v674, %v12
  %v676 = vsub.f32 0.0, %v43
  %v677 = vadd.f32 %v676, %v16
  %v678 = vsub.f32 0.0, %v45
  %v679 = vadd.f32 %v678, %v20
  %v680 = vsub.f32 0.0, %v47
  %v681 = vadd.f32 %v680, %v24
  %v682 = vsub.f32 0.0, %v679
  %v683 = vadd.f32 %v675, %v682
  %s684 = scalar_lea.vmem %s1, 64
  %v685 = vld [vmem:[%s684] sm:$0xff]
  %v687 = vsel %vm53, %v685, 0
  %v690 = vsel %vm57, %v683, 0
  %692 = vmatprep.subr.mxu0 0.0
  %693 = vmatpush1.msra.mxu0 %v690
  %694 = vmatprep.subr.mxu0 0.0
  %695 = vmatpush1.msra.mxu0 0.0
  %696 = vmatprep.subr.mxu0 0.0
  %697 = vmatpush1.msra.mxu0 0.0
  %698 = vmatprep.subr.mxu0 0.0
  %699 = vmatpush1.msra.mxu0 0.0
  %700 = vmatprep.subr.mxu0 0.0
  %701 = vmatpush1.msra.mxu0 0.0
  %702 = vmatprep.subr.mxu0 0.0
  %703 = vmatpush1.msra.mxu0 0.0
  %704 = vmatprep.subr.mxu0 0.0
  %705 = vmatpush1.msra.mxu0 0.0
  %706 = vmatprep.subr.mxu0 0.0
  %707 = vmatpush1.msra.mxu0 0.0
  %708 = vmatprep.subr.mxu0 0.0
  %709 = vmatpush1.msra.mxu0 0.0
  %710 = vmatprep.subr.mxu0 0.0
  %711 = vmatpush1.msra.mxu0 0.0
  %712 = vmatprep.subr.mxu0 0.0
  %713 = vmatpush1.msra.mxu0 0.0
  %714 = vmatprep.subr.mxu0 0.0
  %715 = vmatpush1.msra.mxu0 0.0
  %716 = vmatprep.subr.mxu0 0.0
  %717 = vmatpush1.msra.mxu0 0.0
  %718 = vmatprep.subr.mxu0 0.0
  %719 = vmatpush1.msra.mxu0 0.0
  %720 = vmatprep.subr.mxu0 0.0
  %721 = vmatpush1.msra.mxu0 0.0
  %722 = vmatprep.subr.mxu0 0.0
  %723 = vmatpush1.msra.mxu0 0.0
  %724 = vmatprep.subr.mxu0 0.0
  %725 = vmatpush1.msra.mxu0 0.0
  %726 = vmatprep.subr.mxu0 0.0
  %727 = vmatpush1.msra.mxu0 0.0
  %728 = vmatprep.subr.mxu0 0.0
  %729 = vmatpush1.msra.mxu0 0.0
  %730 = vmatprep.subr.mxu0 0.0
  %731 = vmatpush1.msra.mxu0 0.0
  %732 = vmatprep.subr.mxu0 0.0
  %733 = vmatpush1.msra.mxu0 0.0
  %734 = vmatprep.subr.mxu0 0.0
  %735 = vmatpush1.msra.mxu0 0.0
  %736 = vmatprep.subr.mxu0 0.0
  %737 = vmatpush1.msra.mxu0 0.0
  %738 = vmatprep.subr.mxu0 0.0
  %739 = vmatpush1.msra.mxu0 0.0
  %740 = vmatprep.subr.mxu0 0.0
  %741 = vmatpush1.msra.mxu0 0.0
  %742 = vmatprep.subr.mxu0 0.0
  %743 = vmatpush1.msra.mxu0 0.0
  %744 = vmatprep.subr.mxu0 0.0
  %745 = vmatpush1.msra.mxu0 0.0
  %746 = vmatprep.subr.mxu0 0.0
  %747 = vmatpush1.msra.mxu0 0.0
  %748 = vmatprep.subr.mxu0 0.0
  %749 = vmatpush1.msra.mxu0 0.0
  %750 = vmatprep.subr.mxu0 0.0
  %751 = vmatpush1.msra.mxu0 0.0
  %752 = vmatprep.subr.mxu0 0.0
  %753 = vmatpush1.msra.mxu0 0.0
  %754 = vmatprep.subr.mxu0 0.0
  %755 = vmatpush1.msra.mxu0 0.0
  %756 = vmatprep.mubr.f32.mxu0 0.0
  %757 = vmatmul.mubr.f32.gmra.mrb[0].mxu0 %v687
  %v758 = vpop.f32.mrb[0].mxu0
  %v759 = vadd.f32 0.0, %v758
  %v760 = vpop.f32.mrb[0].mxu0
  %761 = vdwg.mxu0
  %v762 = vadd.f32 %v204, %v759
  %v763 = vsub.f32 0.0, %v759
  %v764 = vadd.f32 %v128, %v763
  %v765 = vadd.f32 %v677, %v679
  %s766 = scalar_lea.vmem %s1, 72
  %v767 = vld [vmem:[%s766] sm:$0xff]
  %v769 = vsel %vm53, %v767, 0
  %v772 = vsel %vm57, %v765, 0
  %774 = vmatprep.subr.mxu0 0.0
  %775 = vmatpush1.msra.mxu0 %v772
  %776 = vmatprep.subr.mxu0 0.0
  %777 = vmatpush1.msra.mxu0 0.0
  %778 = vmatprep.subr.mxu0 0.0
  %779 = vmatpush1.msra.mxu0 0.0
  %780 = vmatprep.subr.mxu0 0.0
  %781 = vmatpush1.msra.mxu0 0.0
  %782 = vmatprep.subr.mxu0 0.0
  %783 = vmatpush1.msra.mxu0 0.0
  %784 = vmatprep.subr.mxu0 0.0
  %785 = vmatpush1.msra.mxu0 0.0
  %786 = vmatprep.subr.mxu0 0.0
  %787 = vmatpush1.msra.mxu0 0.0
  %788 = vmatprep.subr.mxu0 0.0
  %789 = vmatpush1.msra.mxu0 0.0
  %790 = vmatprep.subr.mxu0 0.0
  %791 = vmatpush1.msra.mxu0 0.0
  %792 = vmatprep.subr.mxu0 0.0
  %793 = vmatpush1.msra.mxu0 0.0
  %794 = vmatprep.subr.mxu0 0.0
  %795 = vmatpush1.msra.mxu0 0.0
  %796 = vmatprep.subr.mxu0 0.0
  %797 = vmatpush1.msra.mxu0 0.0
  %798 = vmatprep.subr.mxu0 0.0
  %799 = vmatpush1.msra.mxu0 0.0
  %800 = vmatprep.subr.mxu0 0.0
  %801 = vmatpush1.msra.mxu0 0.0
  %802 = vmatprep.subr.mxu0 0.0
  %803 = vmatpush1.msra.mxu0 0.0
  %804 = vmatprep.subr.mxu0 0.0
  %805 = vmatpush1.msra.mxu0 0.0
  %806 = vmatprep.subr.mxu0 0.0
  %807 = vmatpush1.msra.mxu0 0.0
  %808 = vmatprep.subr.mxu0 0.0
  %809 = vmatpush1.msra.mxu0 0.0
  %810 = vmatprep.subr.mxu0 0.0
  %811 = vmatpush1.msra.mxu0 0.0
  %812 = vmatprep.subr.mxu0 0.0
  %813 = vmatpush1.msra.mxu0 0.0
  %814 = vmatprep.subr.mxu0 0.0
  %815 = vmatpush1.msra.mxu0 0.0
  %816 = vmatprep.subr.mxu0 0.0
  %817 = vmatpush1.msra.mxu0 0.0
  %818 = vmatprep.subr.mxu0 0.0
  %819 = vmatpush1.msra.mxu0 0.0
  %820 = vmatprep.subr.mxu0 0.0
  %821 = vmatpush1.msra.mxu0 0.0
  %822 = vmatprep.subr.mxu0 0.0
  %823 = vmatpush1.msra.mxu0 0.0
  %824 = vmatprep.subr.mxu0 0.0
  %825 = vmatpush1.msra.mxu0 0.0
  %826 = vmatprep.subr.mxu0 0.0
  %827 = vmatpush1.msra.mxu0 0.0
  %828 = vmatprep.subr.mxu0 0.0
  %829 = vmatpush1.msra.mxu0 0.0
  %830 = vmatprep.subr.mxu0 0.0
  %831 = vmatpush1.msra.mxu0 0.0
  %832 = vmatprep.subr.mxu0 0.0
  %833 = vmatpush1.msra.mxu0 0.0
  %834 = vmatprep.subr.mxu0 0.0
  %835 = vmatpush1.msra.mxu0 0.0
  %836 = vmatprep.subr.mxu0 0.0
  %837 = vmatpush1.msra.mxu0 0.0
  %838 = vmatprep.mubr.f32.mxu0 0.0
  %839 = vmatmul.mubr.f32.gmra.mrb[0].mxu0 %v769
  %v840 = vpop.f32.mrb[0].mxu0
  %v841 = vadd.f32 0.0, %v840
  %v842 = vpop.f32.mrb[0].mxu0
  %843 = vdwg.mxu0
  %v844 = vadd.f32 %v359, %v841
  %v845 = vsub.f32 0.0, %v841
  %v846 = vadd.f32 %v283, %v845
  %v847 = vsub.f32 0.0, %v677
  %v848 = vadd.f32 %v847, %v679
  %s849 = scalar_lea.vmem %s1, 80
  %v850 = vld [vmem:[%s849] sm:$0xff]
  %v852 = vsel %vm53, %v850, 0
  %v855 = vsel %vm57, %v848, 0
  %857 = vmatprep.subr.mxu0 0.0
  %858 = vmatpush1.msra.mxu0 %v855
  %859 = vmatprep.subr.mxu0 0.0
  %860 = vmatpush1.msra.mxu0 0.0
  %861 = vmatprep.subr.mxu0 0.0
  %862 = vmatpush1.msra.mxu0 0.0
  %863 = vmatprep.subr.mxu0 0.0
  %864 = vmatpush1.msra.mxu0 0.0
  %865 = vmatprep.subr.mxu0 0.0
  %866 = vmatpush1.msra.mxu0 0.0
  %867 = vmatprep.subr.mxu0 0.0
  %868 = vmatpush1.msra.mxu0 0.0
  %869 = vmatprep.subr.mxu0 0.0
  %870 = vmatpush1.msra.mxu0 0.0
  %871 = vmatprep.subr.mxu0 0.0
  %872 = vmatpush1.msra.mxu0 0.0
  %873 = vmatprep.subr.mxu0 0.0
  %874 = vmatpush1.msra.mxu0 0.0
  %875 = vmatprep.subr.mxu0 0.0
  %876 = vmatpush1.msra.mxu0 0.0
  %877 = vmatprep.subr.mxu0 0.0
  %878 = vmatpush1.msra.mxu0 0.0
  %879 = vmatprep.subr.mxu0 0.0
  %880 = vmatpush1.msra.mxu0 0.0
  %881 = vmatprep.subr.mxu0 0.0
  %882 = vmatpush1.msra.mxu0 0.0
  %883 = vmatprep.subr.mxu0 0.0
  %884 = vmatpush1.msra.mxu0 0.0
  %885 = vmatprep.subr.mxu0 0.0
  %886 = vmatpush1.msra.mxu0 0.0
  %887 = vmatprep.subr.mxu0 0.0
  %888 = vmatpush1.msra.mxu0 0.0
  %889 = vmatprep.subr.mxu0 0.0
  %890 = vmatpush1.msra.mxu0 0.0
  %891 = vmatprep.subr.mxu0 0.0
  %892 = vmatpush1.msra.mxu0 0.0
  %893 = vmatprep.subr.mxu0 0.0
  %894 = vmatpush1.msra.mxu0 0.0
  %895 = vmatprep.subr.mxu0 0.0
  %896 = vmatpush1.msra.mxu0 0.0
  %897 = vmatprep.subr.mxu0 0.0
  %898 = vmatpush1.msra.mxu0 0.0
  %899 = vmatprep.subr.mxu0 0.0
  %900 = vmatpush1.msra.mxu0 0.0
  %901 = vmatprep.subr.mxu0 0.0
  %902 = vmatpush1.msra.mxu0 0.0
  %903 = vmatprep.subr.mxu0 0.0
  %904 = vmatpush1.msra.mxu0 0.0
  %905 = vmatprep.subr.mxu0 0.0
  %906 = vmatpush1.msra.mxu0 0.0
  %907 = vmatprep.subr.mxu0 0.0
  %908 = vmatpush1.msra.mxu0 0.0
  %909 = vmatprep.subr.mxu0 0.0
  %910 = vmatpush1.msra.mxu0 0.0
  %911 = vmatprep.subr.mxu0 0.0
  %912 = vmatpush1.msra.mxu0 0.0
  %913 = vmatprep.subr.mxu0 0.0
  %914 = vmatpush1.msra.mxu0 0.0
  %915 = vmatprep.subr.mxu0 0.0
  %916 = vmatpush1.msra.mxu0 0.0
  %917 = vmatprep.subr.mxu0 0.0
  %918 = vmatpush1.msra.mxu0 0.0
  %919 = vmatprep.subr.mxu0 0.0
  %920 = vmatpush1.msra.mxu0 0.0
  %921 = vmatprep.mubr.f32.mxu0 0.0
  %922 = vmatmul.mubr.f32.gmra.mrb[0].mxu0 %v852
  %v923 = vpop.f32.mrb[0].mxu0
  %v924 = vadd.f32 0.0, %v923
  %v925 = vpop.f32.mrb[0].mxu0
  %926 = vdwg.mxu0
  %v927 = vadd.f32 %v515, %v924
  %v928 = vsub.f32 0.0, %v924
  %v929 = vadd.f32 %v439, %v928
  %v930 = vsub.f32 0.0, %v681
  %v931 = vadd.f32 %v677, %v930
  %s932 = scalar_lea.vmem %s1, 88
  %v933 = vld [vmem:[%s932] sm:$0xff]
  %v935 = vsel %vm53, %v933, 0
  %v938 = vsel %vm57, %v931, 0
  %940 = vmatprep.subr.mxu0 0.0
  %941 = vmatpush1.msra.mxu0 %v938
  %942 = vmatprep.subr.mxu0 0.0
  %943 = vmatpush1.msra.mxu0 0.0
  %944 = vmatprep.subr.mxu0 0.0
  %945 = vmatpush1.msra.mxu0 0.0
  %946 = vmatprep.subr.mxu0 0.0
  %947 = vmatpush1.msra.mxu0 0.0
  %948 = vmatprep.subr.mxu0 0.0
  %949 = vmatpush1.msra.mxu0 0.0
  %950 = vmatprep.subr.mxu0 0.0
  %951 = vmatpush1.msra.mxu0 0.0
  %952 = vmatprep.subr.mxu0 0.0
  %953 = vmatpush1.msra.mxu0 0.0
  %954 = vmatprep.subr.mxu0 0.0
  %955 = vmatpush1.msra.mxu0 0.0
  %956 = vmatprep.subr.mxu0 0.0
  %957 = vmatpush1.msra.mxu0 0.0
  %958 = vmatprep.subr.mxu0 0.0
  %959 = vmatpush1.msra.mxu0 0.0
  %960 = vmatprep.subr.mxu0 0.0
  %961 = vmatpush1.msra.mxu0 0.0
  %962 = vmatprep.subr.mxu0 0.0
  %963 = vmatpush1.msra.mxu0 0.0
  %964 = vmatprep.subr.mxu0 0.0
  %965 = vmatpush1.msra.mxu0 0.0
  %966 = vmatprep.subr.mxu0 0.0
  %967 = vmatpush1.msra.mxu0 0.0
  %968 = vmatprep.subr.mxu0 0.0
  %969 = vmatpush1.msra.mxu0 0.0
  %970 = vmatprep.subr.mxu0 0.0
  %971 = vmatpush1.msra.mxu0 0.0
  %972 = vmatprep.subr.mxu0 0.0
  %973 = vmatpush1.msra.mxu0 0.0
  %974 = vmatprep.subr.mxu0 0.0
  %975 = vmatpush1.msra.mxu0 0.0
  %976 = vmatprep.subr.mxu0 0.0
  %977 = vmatpush1.msra.mxu0 0.0
  %978 = vmatprep.subr.mxu0 0.0
  %979 = vmatpush1.msra.mxu0 0.0
  %980 = vmatprep.subr.mxu0 0.0
  %981 = vmatpush1.msra.mxu0 0.0
  %982 = vmatprep.subr.mxu0 0.0
  %983 = vmatpush1.msra.mxu0 0.0
  %984 = vmatprep.subr.mxu0 0.0
  %985 = vmatpush1.msra.mxu0 0.0
  %986 = vmatprep.subr.mxu0 0.0
  %987 = vmatpush1.msra.mxu0 0.0
  %988 = vmatprep.subr.mxu0 0.0
  %989 = vmatpush1.msra.mxu0 0.0
  %990 = vmatprep.subr.mxu0 0.0
  %991 = vmatpush1.msra.mxu0 0.0
  %992 = vmatprep.subr.mxu0 0.0
  %993 = vmatpush1.msra.mxu0 0.0
  %994 = vmatprep.subr.mxu0 0.0
  %995 = vmatpush1.msra.mxu0 0.0
  %996 = vmatprep.subr.mxu0 0.0
  %997 = vmatpush1.msra.mxu0 0.0
  %998 = vmatprep.subr.mxu0 0.0
  %999 = vmatpush1.msra.mxu0 0.0
  %1000 = vmatprep.subr.mxu0 0.0
  %1001 = vmatpush1.msra.mxu0 0.0
  %1002 = vmatprep.subr.mxu0 0.0
  %1003 = vmatpush1.msra.mxu0 0.0
  %1004 = vmatprep.mubr.f32.mxu0 0.0
  %1005 = vmatmul.mubr.f32.gmra.mrb[0].mxu0 %v935
  %v1006 = vpop.f32.mrb[0].mxu0
  %v1007 = vadd.f32 0.0, %v1006
  %v1008 = vpop.f32.mrb[0].mxu0
  %1009 = vdwg.mxu0
  %v1010 = vadd.f32 %v671, %v1007
  %v1011 = vsub.f32 0.0, %v1007
  %v1012 = vadd.f32 %v595, %v1011
  %v1013 = vld [vmem:[%s0 + $0x30] sm:$0xf]
  %v1014 = vsub.f32 0.0, %v1013
  %v1015 = vadd.f32 %v41, %v1014
  %v1016 = vld [vmem:[%s0 + $0x34] sm:$0xf]
  %v1017 = vsub.f32 0.0, %v1016
  %v1018 = vadd.f32 %v43, %v1017
  %v1019 = vld [vmem:[%s0 + $0x38] sm:$0xf]
  %v1020 = vsub.f32 0.0, %v1019
  %v1021 = vadd.f32 %v45, %v1020
  %v1022 = vld [vmem:[%s0 + $0x3c] sm:$0xf]
  %v1023 = vsub.f32 0.0, %v1022
  %v1024 = vadd.f32 %v47, %v1023
  %v1025 = vsub.f32 0.0, %v1021
  %v1026 = vadd.f32 %v1015, %v1025
  %s1027 = scalar_lea.vmem %s1, 96
  %v1028 = vld [vmem:[%s1027] sm:$0xff]
  %v1030 = vsel %vm53, %v1028, 0
  %v1033 = vsel %vm57, %v1026, 0
  %1035 = vmatprep.subr.mxu0 0.0
  %1036 = vmatpush1.msra.mxu0 %v1033
  %1037 = vmatprep.subr.mxu0 0.0
  %1038 = vmatpush1.msra.mxu0 0.0
  %1039 = vmatprep.subr.mxu0 0.0
  %1040 = vmatpush1.msra.mxu0 0.0
  %1041 = vmatprep.subr.mxu0 0.0
  %1042 = vmatpush1.msra.mxu0 0.0
  %1043 = vmatprep.subr.mxu0 0.0
  %1044 = vmatpush1.msra.mxu0 0.0
  %1045 = vmatprep.subr.mxu0 0.0
  %1046 = vmatpush1.msra.mxu0 0.0
  %1047 = vmatprep.subr.mxu0 0.0
  %1048 = vmatpush1.msra.mxu0 0.0
  %1049 = vmatprep.subr.mxu0 0.0
  %1050 = vmatpush1.msra.mxu0 0.0
  %1051 = vmatprep.subr.mxu0 0.0
  %1052 = vmatpush1.msra.mxu0 0.0
  %1053 = vmatprep.subr.mxu0 0.0
  %1054 = vmatpush1.msra.mxu0 0.0
  %1055 = vmatprep.subr.mxu0 0.0
  %1056 = vmatpush1.msra.mxu0 0.0
  %1057 = vmatprep.subr.mxu0 0.0
  %1058 = vmatpush1.msra.mxu0 0.0
  %1059 = vmatprep.subr.mxu0 0.0
  %1060 = vmatpush1.msra.mxu0 0.0
  %1061 = vmatprep.subr.mxu0 0.0
  %1062 = vmatpush1.msra.mxu0 0.0
  %1063 = vmatprep.subr.mxu0 0.0
  %1064 = vmatpush1.msra.mxu0 0.0
  %1065 = vmatprep.subr.mxu0 0.0
  %1066 = vmatpush1.msra.mxu0 0.0
  %1067 = vmatprep.subr.mxu0 0.0
  %1068 = vmatpush1.msra.mxu0 0.0
  %1069 = vmatprep.subr.mxu0 0.0
  %1070 = vmatpush1.msra.mxu0 0.0
  %1071 = vmatprep.subr.mxu0 0.0
  %1072 = vmatpush1.msra.mxu0 0.0
  %1073 = vmatprep.subr.mxu0 0.0
  %1074 = vmatpush1.msra.mxu0 0.0
  %1075 = vmatprep.subr.mxu0 0.0
  %1076 = vmatpush1.msra.mxu0 0.0
  %1077 = vmatprep.subr.mxu0 0.0
  %1078 = vmatpush1.msra.mxu0 0.0
  %1079 = vmatprep.subr.mxu0 0.0
  %1080 = vmatpush1.msra.mxu0 0.0
  %1081 = vmatprep.subr.mxu0 0.0
  %1082 = vmatpush1.msra.mxu0 0.0
  %1083 = vmatprep.subr.mxu0 0.0
  %1084 = vmatpush1.msra.mxu0 0.0
  %1085 = vmatprep.subr.mxu0 0.0
  %1086 = vmatpush1.msra.mxu0 0.0
  %1087 = vmatprep.subr.mxu0 0.0
  %1088 = vmatpush1.msra.mxu0 0.0
  %1089 = vmatprep.subr.mxu0 0.0
  %1090 = vmatpush1.msra.mxu0 0.0
  %1091 = vmatprep.subr.mxu0 0.0
  %1092 = vmatpush1.msra.mxu0 0.0
  %1093 = vmatprep.subr.mxu0 0.0
  %1094 = vmatpush1.msra.mxu0 0.0
  %1095 = vmatprep.subr.mxu0 0.0
  %1096 = vmatpush1.msra.mxu0 0.0
  %1097 = vmatprep.subr.mxu0 0.0
  %1098 = vmatpush1.msra.mxu0 0.0
  %1099 = vmatprep.mubr.f32.mxu0 0.0
  %1100 = vmatmul.mubr.f32.gmra.mrb[0].mxu0 %v1030
  %v1101 = vpop.f32.mrb[0].mxu0
  %v1102 = vadd.f32 0.0, %v1101
  %v1103 = vpop.f32.mrb[0].mxu0
  %1104 = vdwg.mxu0
  %v1105 = vsub.f32 0.0, %v1102
  %v1106 = vadd.f32 %v764, %v1105
  %v1107 = vadd.f32 %v1018, %v1021
  %s1108 = scalar_lea.vmem %s1, 104
  %v1109 = vld [vmem:[%s1108] sm:$0xff]
  %v1111 = vsel %vm53, %v1109, 0
  %v1114 = vsel %vm57, %v1107, 0
  %1116 = vmatprep.subr.mxu0 0.0
  %1117 = vmatpush1.msra.mxu0 %v1114
  %1118 = vmatprep.subr.mxu0 0.0
  %1119 = vmatpush1.msra.mxu0 0.0
  %1120 = vmatprep.subr.mxu0 0.0
  %1121 = vmatpush1.msra.mxu0 0.0
  %1122 = vmatprep.subr.mxu0 0.0
  %1123 = vmatpush1.msra.mxu0 0.0
  %1124 = vmatprep.subr.mxu0 0.0
  %1125 = vmatpush1.msra.mxu0 0.0
  %1126 = vmatprep.subr.mxu0 0.0
  %1127 = vmatpush1.msra.mxu0 0.0
  %1128 = vmatprep.subr.mxu0 0.0
  %1129 = vmatpush1.msra.mxu0 0.0
  %1130 = vmatprep.subr.mxu0 0.0
  %1131 = vmatpush1.msra.mxu0 0.0
  %1132 = vmatprep.subr.mxu0 0.0
  %1133 = vmatpush1.msra.mxu0 0.0
  %1134 = vmatprep.subr.mxu0 0.0
  %1135 = vmatpush1.msra.mxu0 0.0
  %1136 = vmatprep.subr.mxu0 0.0
  %1137 = vmatpush1.msra.mxu0 0.0
  %1138 = vmatprep.subr.mxu0 0.0
  %1139 = vmatpush1.msra.mxu0 0.0
  %1140 = vmatprep.subr.mxu0 0.0
  %1141 = vmatpush1.msra.mxu0 0.0
  %1142 = vmatprep.subr.mxu0 0.0
  %1143 = vmatpush1.msra.mxu0 0.0
  %1144 = vmatprep.subr.mxu0 0.0
  %1145 = vmatpush1.msra.mxu0 0.0
  %1146 = vmatprep.subr.mxu0 0.0
  %1147 = vmatpush1.msra.mxu0 0.0
  %1148 = vmatprep.subr.mxu0 0.0
  %1149 = vmatpush1.msra.mxu0 0.0
  %1150 = vmatprep.subr.mxu0 0.0
  %1151 = vmatpush1.msra.mxu0 0.0
  %1152 = vmatprep.subr.mxu0 0.0
  %1153 = vmatpush1.msra.mxu0 0.0
  %1154 = vmatprep.subr.mxu0 0.0
  %1155 = vmatpush1.msra.mxu0 0.0
  %1156 = vmatprep.subr.mxu0 0.0
  %1157 = vmatpush1.msra.mxu0 0.0
  %1158 = vmatprep.subr.mxu0 0.0
  %1159 = vmatpush1.msra.mxu0 0.0
  %1160 = vmatprep.subr.mxu0 0.0
  %1161 = vmatpush1.msra.mxu0 0.0
  %1162 = vmatprep.subr.mxu0 0.0
  %1163 = vmatpush1.msra.mxu0 0.0
  %1164 = vmatprep.subr.mxu0 0.0
  %1165 = vmatpush1.msra.mxu0 0.0
  %1166 = vmatprep.subr.mxu0 0.0
  %1167 = vmatpush1.msra.mxu0 0.0
  %1168 = vmatprep.subr.mxu0 0.0
  %1169 = vmatpush1.msra.mxu0 0.0
  %1170 = vmatprep.subr.mxu0 0.0
  %1171 = vmatpush1.msra.mxu0 0.0
  %1172 = vmatprep.subr.mxu0 0.0
  %1173 = vmatpush1.msra.mxu0 0.0
  %1174 = vmatprep.subr.mxu0 0.0
  %1175 = vmatpush1.msra.mxu0 0.0
  %1176 = vmatprep.subr.mxu0 0.0
  %1177 = vmatpush1.msra.mxu0 0.0
  %1178 = vmatprep.subr.mxu0 0.0
  %1179 = vmatpush1.msra.mxu0 0.0
  %1180 = vmatprep.mubr.f32.mxu0 0.0
  %1181 = vmatmul.mubr.f32.gmra.mrb[0].mxu0 %v1111
  %v1182 = vpop.f32.mrb[0].mxu0
  %v1183 = vadd.f32 0.0, %v1182
  %v1184 = vpop.f32.mrb[0].mxu0
  %1185 = vdwg.mxu0
  %v1186 = vsub.f32 0.0, %v1183
  %v1187 = vadd.f32 %v846, %v1186
  %v1188 = vsub.f32 0.0, %v1018
  %v1189 = vadd.f32 %v1188, %v1021
  %s1190 = scalar_lea.vmem %s1, 112
  %v1191 = vld [vmem:[%s1190] sm:$0xff]
  %v1193 = vsel %vm53, %v1191, 0
  %v1196 = vsel %vm57, %v1189, 0
  %1198 = vmatprep.subr.mxu0 0.0
  %1199 = vmatpush1.msra.mxu0 %v1196
  %1200 = vmatprep.subr.mxu0 0.0
  %1201 = vmatpush1.msra.mxu0 0.0
  %1202 = vmatprep.subr.mxu0 0.0
  %1203 = vmatpush1.msra.mxu0 0.0
  %1204 = vmatprep.subr.mxu0 0.0
  %1205 = vmatpush1.msra.mxu0 0.0
  %1206 = vmatprep.subr.mxu0 0.0
  %1207 = vmatpush1.msra.mxu0 0.0
  %1208 = vmatprep.subr.mxu0 0.0
  %1209 = vmatpush1.msra.mxu0 0.0
  %1210 = vmatprep.subr.mxu0 0.0
  %1211 = vmatpush1.msra.mxu0 0.0
  %1212 = vmatprep.subr.mxu0 0.0
  %1213 = vmatpush1.msra.mxu0 0.0
  %1214 = vmatprep.subr.mxu0 0.0
  %1215 = vmatpush1.msra.mxu0 0.0
  %1216 = vmatprep.subr.mxu0 0.0
  %1217 = vmatpush1.msra.mxu0 0.0
  %1218 = vmatprep.subr.mxu0 0.0
  %1219 = vmatpush1.msra.mxu0 0.0
  %1220 = vmatprep.subr.mxu0 0.0
  %1221 = vmatpush1.msra.mxu0 0.0
  %1222 = vmatprep.subr.mxu0 0.0
  %1223 = vmatpush1.msra.mxu0 0.0
  %1224 = vmatprep.subr.mxu0 0.0
  %1225 = vmatpush1.msra.mxu0 0.0
  %1226 = vmatprep.subr.mxu0 0.0
  %1227 = vmatpush1.msra.mxu0 0.0
  %1228 = vmatprep.subr.mxu0 0.0
  %1229 = vmatpush1.msra.mxu0 0.0
  %1230 = vmatprep.subr.mxu0 0.0
  %1231 = vmatpush1.msra.mxu0 0.0
  %1232 = vmatprep.subr.mxu0 0.0
  %1233 = vmatpush1.msra.mxu0 0.0
  %1234 = vmatprep.subr.mxu0 0.0
  %1235 = vmatpush1.msra.mxu0 0.0
  %1236 = vmatprep.subr.mxu0 0.0
  %1237 = vmatpush1.msra.mxu0 0.0
  %1238 = vmatprep.subr.mxu0 0.0
  %1239 = vmatpush1.msra.mxu0 0.0
  %1240 = vmatprep.subr.mxu0 0.0
  %1241 = vmatpush1.msra.mxu0 0.0
  %1242 = vmatprep.subr.mxu0 0.0
  %1243 = vmatpush1.msra.mxu0 0.0
  %1244 = vmatprep.subr.mxu0 0.0
  %1245 = vmatpush1.msra.mxu0 0.0
  %1246 = vmatprep.subr.mxu0 0.0
  %1247 = vmatpush1.msra.mxu0 0.0
  %1248 = vmatprep.subr.mxu0 0.0
  %1249 = vmatpush1.msra.mxu0 0.0
  %1250 = vmatprep.subr.mxu0 0.0
  %1251 = vmatpush1.msra.mxu0 0.0
  %1252 = vmatprep.subr.mxu0 0.0
  %1253 = vmatpush1.msra.mxu0 0.0
  %1254 = vmatprep.subr.mxu0 0.0
  %1255 = vmatpush1.msra.mxu0 0.0
  %1256 = vmatprep.subr.mxu0 0.0
  %1257 = vmatpush1.msra.mxu0 0.0
  %1258 = vmatprep.subr.mxu0 0.0
  %1259 = vmatpush1.msra.mxu0 0.0
  %1260 = vmatprep.subr.mxu0 0.0
  %1261 = vmatpush1.msra.mxu0 0.0
  %1262 = vmatprep.mubr.f32.mxu0 0.0
  %1263 = vmatmul.mubr.f32.gmra.mrb[0].mxu0 %v1193
  %v1264 = vpop.f32.mrb[0].mxu0
  %v1265 = vadd.f32 0.0, %v1264
  %v1266 = vpop.f32.mrb[0].mxu0
  %1267 = vdwg.mxu0
  %v1268 = vsub.f32 0.0, %v1265
  %v1269 = vadd.f32 %v929, %v1268
  %v1270 = vsub.f32 0.0, %v1024
  %v1271 = vadd.f32 %v1018, %v1270
  %s1272 = scalar_lea.vmem %s1, 120
  %v1273 = vld [vmem:[%s1272] sm:$0xff]
  %v1275 = vsel %vm53, %v1273, 0
  %v1278 = vsel %vm57, %v1271, 0
  %1280 = vmatprep.subr.mxu0 0.0
  %1281 = vmatpush1.msra.mxu0 %v1278
  %1282 = vmatprep.subr.mxu0 0.0
  %1283 = vmatpush1.msra.mxu0 0.0
  %1284 = vmatprep.subr.mxu0 0.0
  %1285 = vmatpush1.msra.mxu0 0.0
  %1286 = vmatprep.subr.mxu0 0.0
  %1287 = vmatpush1.msra.mxu0 0.0
  %1288 = vmatprep.subr.mxu0 0.0
  %1289 = vmatpush1.msra.mxu0 0.0
  %1290 = vmatprep.subr.mxu0 0.0
  %1291 = vmatpush1.msra.mxu0 0.0
  %1292 = vmatprep.subr.mxu0 0.0
  %1293 = vmatpush1.msra.mxu0 0.0
  %1294 = vmatprep.subr.mxu0 0.0
  %1295 = vmatpush1.msra.mxu0 0.0
  %1296 = vmatprep.subr.mxu0 0.0
  %1297 = vmatpush1.msra.mxu0 0.0
  %1298 = vmatprep.subr.mxu0 0.0
  %1299 = vmatpush1.msra.mxu0 0.0
  %1300 = vmatprep.subr.mxu0 0.0
  %1301 = vmatpush1.msra.mxu0 0.0
  %1302 = vmatprep.subr.mxu0 0.0
  %1303 = vmatpush1.msra.mxu0 0.0
  %1304 = vmatprep.subr.mxu0 0.0
  %1305 = vmatpush1.msra.mxu0 0.0
  %1306 = vmatprep.subr.mxu0 0.0
  %1307 = vmatpush1.msra.mxu0 0.0
  %1308 = vmatprep.subr.mxu0 0.0
  %1309 = vmatpush1.msra.mxu0 0.0
  %1310 = vmatprep.subr.mxu0 0.0
  %1311 = vmatpush1.msra.mxu0 0.0
  %1312 = vmatprep.subr.mxu0 0.0
  %1313 = vmatpush1.msra.mxu0 0.0
  %1314 = vmatprep.subr.mxu0 0.0
  %1315 = vmatpush1.msra.mxu0 0.0
  %1316 = vmatprep.subr.mxu0 0.0
  %1317 = vmatpush1.msra.mxu0 0.0
  %1318 = vmatprep.subr.mxu0 0.0
  %1319 = vmatpush1.msra.mxu0 0.0
  %1320 = vmatprep.subr.mxu0 0.0
  %1321 = vmatpush1.msra.mxu0 0.0
  %1322 = vmatprep.subr.mxu0 0.0
  %1323 = vmatpush1.msra.mxu0 0.0
  %1324 = vmatprep.subr.mxu0 0.0
  %1325 = vmatpush1.msra.mxu0 0.0
  %1326 = vmatprep.subr.mxu0 0.0
  %1327 = vmatpush1.msra.mxu0 0.0
  %1328 = vmatprep.subr.mxu0 0.0
  %1329 = vmatpush1.msra.mxu0 0.0
  %1330 = vmatprep.subr.mxu0 0.0
  %1331 = vmatpush1.msra.mxu0 0.0
  %1332 = vmatprep.subr.mxu0 0.0
  %1333 = vmatpush1.msra.mxu0 0.0
  %1334 = vmatprep.subr.mxu0 0.0
  %1335 = vmatpush1.msra.mxu0 0.0
  %1336 = vmatprep.subr.mxu0 0.0
  %1337 = vmatpush1.msra.mxu0 0.0
  %1338 = vmatprep.subr.mxu0 0.0
  %1339 = vmatpush1.msra.mxu0 0.0
  %1340 = vmatprep.subr.mxu0 0.0
  %1341 = vmatpush1.msra.mxu0 0.0
  %1342 = vmatprep.subr.mxu0 0.0
  %1343 = vmatpush1.msra.mxu0 0.0
  %1344 = vmatprep.mubr.f32.mxu0 0.0
  %1345 = vmatmul.mubr.f32.gmra.mrb[0].mxu0 %v1275
  %v1346 = vpop.f32.mrb[0].mxu0
  %v1347 = vadd.f32 0.0, %v1346
  %v1348 = vpop.f32.mrb[0].mxu0
  %1349 = vdwg.mxu0
  %v1350 = vsub.f32 0.0, %v1347
  %v1351 = vadd.f32 %v1012, %v1350
  %v1352 = vadd.f32 %v762, %v844
  %v1353 = vadd.f32 %v1352, %v927
  %1354 = vst [vmem:[%s2] sm:$0xff] %v1353
  %v1355 = vsub.f32 0.0, %v927
  %v1356 = vadd.f32 %v844, %v1355
  %v1357 = vsub.f32 0.0, %v1010
  %v1358 = vadd.f32 %v1356, %v1357
  %s1359 = scalar_lea.vmem %s2, 8
  %1360 = vst [vmem:[%s1359] sm:$0xff] %v1358
  %v1361 = vadd.f32 %v1106, %v1187
  %v1362 = vadd.f32 %v1361, %v1269
  %s1363 = scalar_lea.vmem %s2, 16
  %1364 = vst [vmem:[%s1363] sm:$0xff] %v1362
  %v1365 = vsub.f32 0.0, %v1269
  %v1366 = vadd.f32 %v1187, %v1365
  %v1367 = vsub.f32 0.0, %v1351
  %v1368 = vadd.f32 %v1366, %v1367
  %s1369 = scalar_lea.vmem %s2, 24
  %1370 = vst [vmem:[%s1369] sm:$0xff] %v1368
  // Predicated region
  $region10: #{winograd_parall_forward.1} parent=0 // pred_check
    _
  $region11: #{winograd_parall_forward.1} parent=0 // pred_check_branch
    %1372 = sbr.rel (0) target = $region13
  $region12: #{winograd_parall_forward.1} parent=0 // pred_region
    _
  $region13: #{winograd_parall_forward.1} parent=0 // pred_fallthru
    _
  // Predicated region
  $region14: #{winograd_parall_forward.1} parent=0 // pred_check
    _
  $region15: #{winograd_parall_forward.1} parent=0 // pred_check_branch
    %1374 = sbr.rel (0) target = $region17
  $region16: #{winograd_parall_forward.1} parent=0 // pred_region
    _
  $region17: #{winograd_parall_forward.1} parent=0 // pred_fallthru
    _

</llo_original>
